<compile_context>
chip_gen: v7x
topology: tpu7x:2x2x1
jax: 0.10.0
libtpu: 0.0.40
codegen_flags: <defaults>
</compile_context>

<pallas_src>
import functools

import jax
import jax.numpy as jnp
import numpy as np
from jax import lax
from jax.experimental import pallas as pl
from jax.experimental.pallas import tpu as pltpu

# ------------------------- model hyperparameters -------------------------
N_TIMES = 8          # n_times (sequence length / rows of X)
N_FEATURES = 32      # n_features == d_model == d_K == d_V
HEAD = 4             # number of attention heads
FFN_DIM = 16         # feed_forward_dim
LN_EPS = 1e-5        # nn.LayerNorm default eps


def _layer_norm(x, gamma, beta):
    mu = jnp.mean(x, axis=-1, keepdims=True)
    var = jnp.mean((x - mu) ** 2, axis=-1, keepdims=True)
    return (x - mu) * jax.lax.rsqrt(var + LN_EPS) * gamma + beta


def encoder_layer_kernel(
    x_ref,       # (N, D)
    wqkv_ref,    # (D, 3*H*D)  packed [Q_0..Q_{H-1} | K_0..K_{H-1} | V_0..V_{H-1}]
                 #             (Q block pre-scaled by 1/sqrt(d_K) in the wrapper)
    wm_ref,      # (H, D, D)   weight_multi reshaped per head
    w1_ref,      # (D, F)
    b1_ref,      # (1, F)
    w2_ref,      # (F, D)
    b2_ref,      # (1, D)
    g1_ref,      # (1, D) layer_norm1 weight
    be1_ref,     # (1, D) layer_norm1 bias
    g2_ref,      # (1, D) layer_norm2 weight
    be2_ref,     # (1, D) layer_norm2 bias
    o_ref,       # (N, D)
    *, head, d,
):
    x = x_ref[...]
    n = x.shape[0]

    # ---- fused Q/K/V projection: single lane-dense (N, 3*H*D) matmul ----
    qkv = jnp.dot(x, wqkv_ref[...], preferred_element_type=jnp.float32)

    # ---- per-head attention; output projection accumulated (no concat) ----
    proj = jnp.zeros((n, d), jnp.float32)
    for i in range(head):                       # head count static -> unrolled
        q = qkv[:, i * d:(i + 1) * d]                     # already scaled
        k = qkv[:, (head + i) * d:(head + i + 1) * d]
        v = qkv[:, (2 * head + i) * d:(2 * head + i + 1) * d]

        # q @ k.T without materializing the transpose: contract feature axes.
        s = lax.dot_general(
            q, k,
            dimension_numbers=(((1,), (1,)), ((), ())),
            preferred_element_type=jnp.float32,
        )                                                  # (N, N)

        # row-wise softmax (F.softmax on a 2-D tensor defaults to dim=1).
        # Exact divide for the denominator (approx rcp failed the tolerance).
        s = s - jnp.max(s, axis=-1, keepdims=True)
        p = jnp.exp(s)
        p = p / jnp.sum(p, axis=-1, keepdims=True)

        h_i = jnp.dot(p, v, preferred_element_type=jnp.float32)       # (N, D)
        proj = proj + jnp.dot(h_i, wm_ref[i],
                              preferred_element_type=jnp.float32)     # (N, D)

    # ---- residual + LayerNorm1 ----
    x = _layer_norm(x + proj, g1_ref[...], be1_ref[...])

    # ---- feed-forward (Linear -> ReLU -> Linear) ----
    h = jnp.dot(x, w1_ref[...], preferred_element_type=jnp.float32) + b1_ref[...]
    h = jnp.maximum(h, 0.0)
    ffn = jnp.dot(h, w2_ref[...], preferred_element_type=jnp.float32) + b2_ref[...]

    # ---- residual + LayerNorm2 ----
    o_ref[...] = _layer_norm(x + ffn, g2_ref[...], be2_ref[...])


def encoder_layer(x, params, *, head=HEAD):
    n, d = x.shape
    scale = 1.0 / (d ** 0.5)   # d_K == n_features in the reference module

    # Pack per-head (H, D, D) weights into a single (D, H*D) block, ordered by
    # head along the lane axis; fold the attention scale into the Q block.
    def pack(w):  # (H, D_in, D_out) -> (D_in, H*D_out)
        return jnp.transpose(w, (1, 0, 2)).reshape(d, head * d)

    wqkv = jnp.concatenate(
        [pack(params["wq"]) * scale, pack(params["wk"]), pack(params["wv"])],
        axis=1,
    )                                            # (D, 3*H*D) = (32, 384)
    wm = params["wm"].reshape(head, d, d)        # (H, D, D)

    kernel = functools.partial(encoder_layer_kernel, head=head, d=d)
    vmem = pl.BlockSpec(memory_space=pltpu.MemorySpace.VMEM)
    args = (
        x, wqkv, wm,
        params["w1"], params["b1"], params["w2"], params["b2"],
        params["g1"], params["be1"], params["g2"], params["be2"],
    )
    return pl.pallas_call(
        kernel,
        out_shape=jax.ShapeDtypeStruct((n, d), jnp.float32),
        in_specs=[vmem] * len(args),
        out_specs=vmem,
    )(*args)


def init_params(key, d=N_FEATURES, head=HEAD, ffn_dim=FFN_DIM):
    """Deterministic synthetic init (Xavier-normal-like stds)."""
    ks = jax.random.split(key, 8)
    std_attn = (2.0 / (d + d)) ** 0.5
    std_multi = (2.0 / (head * d + d)) ** 0.5
    std_l1 = (2.0 / (d + ffn_dim)) ** 0.5
    std_l2 = (2.0 / (ffn_dim + d)) ** 0.5
    return dict(
        wq=std_attn * jax.random.normal(ks[0], (head, d, d), jnp.float32),
        wk=std_attn * jax.random.normal(ks[1], (head, d, d), jnp.float32),
        wv=std_attn * jax.random.normal(ks[2], (head, d, d), jnp.float32),
        wm=std_multi * jax.random.normal(ks[3], (head * d, d), jnp.float32),
        # nn.Linear stores (out,in); we keep pre-transposed (in,out) so the
        # kernel does x @ W, which equals x @ W_torch.T.
        w1=std_l1 * jax.random.normal(ks[4], (d, ffn_dim), jnp.float32),
        b1=0.01 * jax.random.normal(ks[5], (1, ffn_dim), jnp.float32),
        w2=std_l2 * jax.random.normal(ks[6], (ffn_dim, d), jnp.float32),
        b2=0.01 * jax.random.normal(ks[7], (1, d), jnp.float32),
        g1=jnp.ones((1, d), jnp.float32),
        be1=jnp.zeros((1, d), jnp.float32),
        g2=jnp.ones((1, d), jnp.float32),
        be2=jnp.zeros((1, d), jnp.float32),
    )


def encoder_layer_ref(x, params, *, head=HEAD):
    """Pure-JAX reference mirroring the PyTorch forward exactly."""
    d = x.shape[1]
    heads = []
    for i in range(head):
        q = x @ params["wq"][i]
        k = x @ params["wk"][i]
        v = x @ params["wv"][i]
        att = jax.nn.softmax((q @ k.T) / (d ** 0.5), axis=-1) @ v
        heads.append(att)
    mha = jnp.concatenate(heads, axis=1)
    x = x + mha @ params["wm"]
    x = _layer_norm(x, params["g1"], params["be1"])
    ffn = jnp.maximum(x @ params["w1"] + params["b1"], 0.0) @ params["w2"] + params["b2"]
    x = x + ffn
    return _layer_norm(x, params["g2"], params["be2"])


if __name__ == "__main__":
    key = jax.random.PRNGKey(0)
    kx, kp = jax.random.split(key)
    x = jax.random.normal(kx, (N_TIMES, N_FEATURES), jnp.float32)
    params = init_params(kp)

    out = encoder_layer(x, params)
    out = jax.block_until_ready(out)

    ref = encoder_layer_ref(x, params)
    np.testing.assert_allclose(np.asarray(out), np.asarray(ref), rtol=1e-3, atol=1e-3)
    print("KERNEL_OK")
</pallas_src>

<mosaic_0001>
module attributes {stable_mosaic.version = 11 : i64} {
  func.func @encoder_layer_kernel(%arg0: memref<8x32xf32, #tpu.memory_space<vmem>>, %arg1: memref<32x384xf32, #tpu.memory_space<vmem>>, %arg2: memref<4x32x32xf32, #tpu.memory_space<vmem>>, %arg3: memref<32x16xf32, #tpu.memory_space<vmem>>, %arg4: memref<1x16xf32, #tpu.memory_space<vmem>>, %arg5: memref<16x32xf32, #tpu.memory_space<vmem>>, %arg6: memref<1x32xf32, #tpu.memory_space<vmem>>, %arg7: memref<1x32xf32, #tpu.memory_space<vmem>>, %arg8: memref<1x32xf32, #tpu.memory_space<vmem>>, %arg9: memref<1x32xf32, #tpu.memory_space<vmem>>, %arg10: memref<1x32xf32, #tpu.memory_space<vmem>>, %arg11: memref<8x32xf32, #tpu.memory_space<vmem>>) attributes {dimension_semantics = [], scalar_prefetch = 0 : i64, scratch_operands = 0 : i64, tpu.core_type = #tpu.core_type<tc>} {
    %c0 = arith.constant 0 : index
    %c0_0 = arith.constant 0 : index
    %0 = vector.load %arg0[%c0, %c0_0] : memref<8x32xf32, #tpu.memory_space<vmem>>, vector<8x32xf32>
    %c0_1 = arith.constant 0 : index
    %c0_2 = arith.constant 0 : index
    %1 = vector.load %arg1[%c0_1, %c0_2] : memref<32x384xf32, #tpu.memory_space<vmem>>, vector<32x384xf32>
    %cst = arith.constant dense<0.000000e+00> : vector<8x384xf32>
    %2 = tpu.matmul %0, %1, %cst {dimension_numbers = #tpu.dot_dimension_numbers<[1], [0], [0], [1], [0, 0, 1, 1], [], []>} : vector<8x32xf32>, vector<32x384xf32>, vector<8x384xf32> -> vector<8x384xf32>
    %cst_3 = arith.constant 0.000000e+00 : f32
    %3 = vector.broadcast %cst_3 : f32 to vector<8x32xf32>
    %4 = vector.extract_strided_slice %2 {offsets = [0, 0], sizes = [8, 32], strides = [1, 1]} : vector<8x384xf32> to vector<8x32xf32>
    %5 = vector.extract_strided_slice %2 {offsets = [0, 128], sizes = [8, 32], strides = [1, 1]} : vector<8x384xf32> to vector<8x32xf32>
    %6 = vector.extract_strided_slice %2 {offsets = [0, 256], sizes = [8, 32], strides = [1, 1]} : vector<8x384xf32> to vector<8x32xf32>
    %cst_4 = arith.constant dense<0.000000e+00> : vector<8x8xf32>
    %7 = tpu.matmul %4, %5, %cst_4 {dimension_numbers = #tpu.dot_dimension_numbers<[1], [1], [0], [0], [0, 0, 1, 0], [], []>} : vector<8x32xf32>, vector<8x32xf32>, vector<8x8xf32> -> vector<8x8xf32>
    %cst_5 = arith.constant dense<0xFF800000> : vector<8xf32>
    %8 = vector.multi_reduction <maximumf>, %7, %cst_5 [1] : vector<8x8xf32> to vector<8xf32>
    %9 = vector.shape_cast %8 : vector<8xf32> to vector<8x1xf32>
    %10 = vector.broadcast %9 : vector<8x1xf32> to vector<8x8xf32>
    %11 = arith.subf %7, %10 : vector<8x8xf32>
    %12 = math.exp %11 : vector<8x8xf32>
    %cst_6 = arith.constant dense<0.000000e+00> : vector<8xf32>
    %13 = vector.multi_reduction <add>, %12, %cst_6 [1] : vector<8x8xf32> to vector<8xf32>
    %14 = vector.shape_cast %13 : vector<8xf32> to vector<8x1xf32>
    %15 = vector.broadcast %14 : vector<8x1xf32> to vector<8x8xf32>
    %16 = arith.divf %12, %15 : vector<8x8xf32>
    %cst_7 = arith.constant dense<0.000000e+00> : vector<8x32xf32>
    %17 = tpu.matmul %16, %6, %cst_7 {dimension_numbers = #tpu.dot_dimension_numbers<[1], [0], [0], [1], [0, 0, 1, 1], [], []>} : vector<8x8xf32>, vector<8x32xf32>, vector<8x32xf32> -> vector<8x32xf32>
    %c0_8 = arith.constant 0 : index
    %c0_9 = arith.constant 0 : index
    %c0_10 = arith.constant 0 : index
    %18 = vector.load %arg2[%c0_8, %c0_9, %c0_10] : memref<4x32x32xf32, #tpu.memory_space<vmem>>, vector<1x32x32xf32>
    %19 = vector.shape_cast %18 : vector<1x32x32xf32> to vector<32x32xf32>
    %cst_11 = arith.constant dense<0.000000e+00> : vector<8x32xf32>
    %20 = tpu.matmul %17, %19, %cst_11 {dimension_numbers = #tpu.dot_dimension_numbers<[1], [0], [0], [1], [0, 0, 1, 1], [], []>} : vector<8x32xf32>, vector<32x32xf32>, vector<8x32xf32> -> vector<8x32xf32>
    %21 = arith.addf %3, %20 : vector<8x32xf32>
    %22 = vector.extract_strided_slice %2 {offsets = [0, 32], sizes = [8, 32], strides = [1, 1]} : vector<8x384xf32> to vector<8x32xf32>
    %23 = vector.extract_strided_slice %2 {offsets = [0, 160], sizes = [8, 32], strides = [1, 1]} : vector<8x384xf32> to vector<8x32xf32>
    %24 = vector.extract_strided_slice %2 {offsets = [0, 288], sizes = [8, 32], strides = [1, 1]} : vector<8x384xf32> to vector<8x32xf32>
    %cst_12 = arith.constant dense<0.000000e+00> : vector<8x8xf32>
    %25 = tpu.matmul %22, %23, %cst_12 {dimension_numbers = #tpu.dot_dimension_numbers<[1], [1], [0], [0], [0, 0, 1, 0], [], []>} : vector<8x32xf32>, vector<8x32xf32>, vector<8x8xf32> -> vector<8x8xf32>
    %cst_13 = arith.constant dense<0xFF800000> : vector<8xf32>
    %26 = vector.multi_reduction <maximumf>, %25, %cst_13 [1] : vector<8x8xf32> to vector<8xf32>
    %27 = vector.shape_cast %26 : vector<8xf32> to vector<8x1xf32>
    %28 = vector.broadcast %27 : vector<8x1xf32> to vector<8x8xf32>
    %29 = arith.subf %25, %28 : vector<8x8xf32>
    %30 = math.exp %29 : vector<8x8xf32>
    %cst_14 = arith.constant dense<0.000000e+00> : vector<8xf32>
    %31 = vector.multi_reduction <add>, %30, %cst_14 [1] : vector<8x8xf32> to vector<8xf32>
    %32 = vector.shape_cast %31 : vector<8xf32> to vector<8x1xf32>
    %33 = vector.broadcast %32 : vector<8x1xf32> to vector<8x8xf32>
    %34 = arith.divf %30, %33 : vector<8x8xf32>
    %cst_15 = arith.constant dense<0.000000e+00> : vector<8x32xf32>
    %35 = tpu.matmul %34, %24, %cst_15 {dimension_numbers = #tpu.dot_dimension_numbers<[1], [0], [0], [1], [0, 0, 1, 1], [], []>} : vector<8x8xf32>, vector<8x32xf32>, vector<8x32xf32> -> vector<8x32xf32>
    %c1 = arith.constant 1 : index
    %c0_16 = arith.constant 0 : index
    %c0_17 = arith.constant 0 : index
    %36 = vector.load %arg2[%c1, %c0_16, %c0_17] : memref<4x32x32xf32, #tpu.memory_space<vmem>>, vector<1x32x32xf32>
    %37 = vector.shape_cast %36 : vector<1x32x32xf32> to vector<32x32xf32>
    %cst_18 = arith.constant dense<0.000000e+00> : vector<8x32xf32>
    %38 = tpu.matmul %35, %37, %cst_18 {dimension_numbers = #tpu.dot_dimension_numbers<[1], [0], [0], [1], [0, 0, 1, 1], [], []>} : vector<8x32xf32>, vector<32x32xf32>, vector<8x32xf32> -> vector<8x32xf32>
    %39 = arith.addf %21, %38 : vector<8x32xf32>
    %40 = vector.extract_strided_slice %2 {offsets = [0, 64], sizes = [8, 32], strides = [1, 1]} : vector<8x384xf32> to vector<8x32xf32>
    %41 = vector.extract_strided_slice %2 {offsets = [0, 192], sizes = [8, 32], strides = [1, 1]} : vector<8x384xf32> to vector<8x32xf32>
    %42 = vector.extract_strided_slice %2 {offsets = [0, 320], sizes = [8, 32], strides = [1, 1]} : vector<8x384xf32> to vector<8x32xf32>
    %cst_19 = arith.constant dense<0.000000e+00> : vector<8x8xf32>
    %43 = tpu.matmul %40, %41, %cst_19 {dimension_numbers = #tpu.dot_dimension_numbers<[1], [1], [0], [0], [0, 0, 1, 0], [], []>} : vector<8x32xf32>, vector<8x32xf32>, vector<8x8xf32> -> vector<8x8xf32>
    %cst_20 = arith.constant dense<0xFF800000> : vector<8xf32>
    %44 = vector.multi_reduction <maximumf>, %43, %cst_20 [1] : vector<8x8xf32> to vector<8xf32>
    %45 = vector.shape_cast %44 : vector<8xf32> to vector<8x1xf32>
    %46 = vector.broadcast %45 : vector<8x1xf32> to vector<8x8xf32>
    %47 = arith.subf %43, %46 : vector<8x8xf32>
    %48 = math.exp %47 : vector<8x8xf32>
    %cst_21 = arith.constant dense<0.000000e+00> : vector<8xf32>
    %49 = vector.multi_reduction <add>, %48, %cst_21 [1] : vector<8x8xf32> to vector<8xf32>
    %50 = vector.shape_cast %49 : vector<8xf32> to vector<8x1xf32>
    %51 = vector.broadcast %50 : vector<8x1xf32> to vector<8x8xf32>
    %52 = arith.divf %48, %51 : vector<8x8xf32>
    %cst_22 = arith.constant dense<0.000000e+00> : vector<8x32xf32>
    %53 = tpu.matmul %52, %42, %cst_22 {dimension_numbers = #tpu.dot_dimension_numbers<[1], [0], [0], [1], [0, 0, 1, 1], [], []>} : vector<8x8xf32>, vector<8x32xf32>, vector<8x32xf32> -> vector<8x32xf32>
    %c2 = arith.constant 2 : index
    %c0_23 = arith.constant 0 : index
    %c0_24 = arith.constant 0 : index
    %54 = vector.load %arg2[%c2, %c0_23, %c0_24] : memref<4x32x32xf32, #tpu.memory_space<vmem>>, vector<1x32x32xf32>
    %55 = vector.shape_cast %54 : vector<1x32x32xf32> to vector<32x32xf32>
    %cst_25 = arith.constant dense<0.000000e+00> : vector<8x32xf32>
    %56 = tpu.matmul %53, %55, %cst_25 {dimension_numbers = #tpu.dot_dimension_numbers<[1], [0], [0], [1], [0, 0, 1, 1], [], []>} : vector<8x32xf32>, vector<32x32xf32>, vector<8x32xf32> -> vector<8x32xf32>
    %57 = arith.addf %39, %56 : vector<8x32xf32>
    %58 = vector.extract_strided_slice %2 {offsets = [0, 96], sizes = [8, 32], strides = [1, 1]} : vector<8x384xf32> to vector<8x32xf32>
    %59 = vector.extract_strided_slice %2 {offsets = [0, 224], sizes = [8, 32], strides = [1, 1]} : vector<8x384xf32> to vector<8x32xf32>
    %60 = vector.extract_strided_slice %2 {offsets = [0, 352], sizes = [8, 32], strides = [1, 1]} : vector<8x384xf32> to vector<8x32xf32>
    %cst_26 = arith.constant dense<0.000000e+00> : vector<8x8xf32>
    %61 = tpu.matmul %58, %59, %cst_26 {dimension_numbers = #tpu.dot_dimension_numbers<[1], [1], [0], [0], [0, 0, 1, 0], [], []>} : vector<8x32xf32>, vector<8x32xf32>, vector<8x8xf32> -> vector<8x8xf32>
    %cst_27 = arith.constant dense<0xFF800000> : vector<8xf32>
    %62 = vector.multi_reduction <maximumf>, %61, %cst_27 [1] : vector<8x8xf32> to vector<8xf32>
    %63 = vector.shape_cast %62 : vector<8xf32> to vector<8x1xf32>
    %64 = vector.broadcast %63 : vector<8x1xf32> to vector<8x8xf32>
    %65 = arith.subf %61, %64 : vector<8x8xf32>
    %66 = math.exp %65 : vector<8x8xf32>
    %cst_28 = arith.constant dense<0.000000e+00> : vector<8xf32>
    %67 = vector.multi_reduction <add>, %66, %cst_28 [1] : vector<8x8xf32> to vector<8xf32>
    %68 = vector.shape_cast %67 : vector<8xf32> to vector<8x1xf32>
    %69 = vector.broadcast %68 : vector<8x1xf32> to vector<8x8xf32>
    %70 = arith.divf %66, %69 : vector<8x8xf32>
    %cst_29 = arith.constant dense<0.000000e+00> : vector<8x32xf32>
    %71 = tpu.matmul %70, %60, %cst_29 {dimension_numbers = #tpu.dot_dimension_numbers<[1], [0], [0], [1], [0, 0, 1, 1], [], []>} : vector<8x8xf32>, vector<8x32xf32>, vector<8x32xf32> -> vector<8x32xf32>
    %c3 = arith.constant 3 : index
    %c0_30 = arith.constant 0 : index
    %c0_31 = arith.constant 0 : index
    %72 = vector.load %arg2[%c3, %c0_30, %c0_31] : memref<4x32x32xf32, #tpu.memory_space<vmem>>, vector<1x32x32xf32>
    %73 = vector.shape_cast %72 : vector<1x32x32xf32> to vector<32x32xf32>
    %cst_32 = arith.constant dense<0.000000e+00> : vector<8x32xf32>
    %74 = tpu.matmul %71, %73, %cst_32 {dimension_numbers = #tpu.dot_dimension_numbers<[1], [0], [0], [1], [0, 0, 1, 1], [], []>} : vector<8x32xf32>, vector<32x32xf32>, vector<8x32xf32> -> vector<8x32xf32>
    %75 = arith.addf %57, %74 : vector<8x32xf32>
    %76 = arith.addf %0, %75 : vector<8x32xf32>
    %c0_33 = arith.constant 0 : index
    %c0_34 = arith.constant 0 : index
    %77 = vector.load %arg7[%c0_33, %c0_34] : memref<1x32xf32, #tpu.memory_space<vmem>>, vector<1x32xf32>
    %c0_35 = arith.constant 0 : index
    %c0_36 = arith.constant 0 : index
    %78 = vector.load %arg8[%c0_35, %c0_36] : memref<1x32xf32, #tpu.memory_space<vmem>>, vector<1x32xf32>
    %cst_37 = arith.constant dense<0.000000e+00> : vector<8xf32>
    %79 = vector.multi_reduction <add>, %76, %cst_37 [1] : vector<8x32xf32> to vector<8xf32>
    %80 = vector.shape_cast %79 : vector<8xf32> to vector<8x1xf32>
    %cst_38 = arith.constant 3.200000e+01 : f32
    %81 = vector.broadcast %cst_38 : f32 to vector<8x1xf32>
    %82 = arith.divf %80, %81 : vector<8x1xf32>
    %83 = vector.broadcast %82 : vector<8x1xf32> to vector<8x32xf32>
    %84 = arith.subf %76, %83 : vector<8x32xf32>
    %85 = arith.mulf %84, %84 : vector<8x32xf32>
    %cst_39 = arith.constant dense<0.000000e+00> : vector<8xf32>
    %86 = vector.multi_reduction <add>, %85, %cst_39 [1] : vector<8x32xf32> to vector<8xf32>
    %87 = vector.shape_cast %86 : vector<8xf32> to vector<8x1xf32>
    %cst_40 = arith.constant 3.200000e+01 : f32
    %88 = vector.broadcast %cst_40 : f32 to vector<8x1xf32>
    %89 = arith.divf %87, %88 : vector<8x1xf32>
    %90 = vector.broadcast %82 : vector<8x1xf32> to vector<8x32xf32>
    %91 = arith.subf %76, %90 : vector<8x32xf32>
    %cst_41 = arith.constant 9.99999974E-6 : f32
    %92 = vector.broadcast %cst_41 : f32 to vector<8x1xf32>
    %93 = arith.addf %89, %92 : vector<8x1xf32>
    %94 = math.rsqrt %93 : vector<8x1xf32>
    %95 = vector.broadcast %94 : vector<8x1xf32> to vector<8x32xf32>
    %96 = arith.mulf %91, %95 : vector<8x32xf32>
    %97 = vector.broadcast %77 : vector<1x32xf32> to vector<8x32xf32>
    %98 = arith.mulf %96, %97 : vector<8x32xf32>
    %99 = vector.broadcast %78 : vector<1x32xf32> to vector<8x32xf32>
    %100 = arith.addf %98, %99 : vector<8x32xf32>
    %c0_42 = arith.constant 0 : index
    %c0_43 = arith.constant 0 : index
    %101 = vector.load %arg3[%c0_42, %c0_43] : memref<32x16xf32, #tpu.memory_space<vmem>>, vector<32x16xf32>
    %cst_44 = arith.constant dense<0.000000e+00> : vector<8x16xf32>
    %102 = tpu.matmul %100, %101, %cst_44 {dimension_numbers = #tpu.dot_dimension_numbers<[1], [0], [0], [1], [0, 0, 1, 1], [], []>} : vector<8x32xf32>, vector<32x16xf32>, vector<8x16xf32> -> vector<8x16xf32>
    %c0_45 = arith.constant 0 : index
    %c0_46 = arith.constant 0 : index
    %103 = vector.load %arg4[%c0_45, %c0_46] : memref<1x16xf32, #tpu.memory_space<vmem>>, vector<1x16xf32>
    %104 = vector.broadcast %103 : vector<1x16xf32> to vector<8x16xf32>
    %105 = arith.addf %102, %104 : vector<8x16xf32>
    %cst_47 = arith.constant 0.000000e+00 : f32
    %106 = vector.broadcast %cst_47 : f32 to vector<8x16xf32>
    %107 = arith.maximumf %105, %106 : vector<8x16xf32>
    %c0_48 = arith.constant 0 : index
    %c0_49 = arith.constant 0 : index
    %108 = vector.load %arg5[%c0_48, %c0_49] : memref<16x32xf32, #tpu.memory_space<vmem>>, vector<16x32xf32>
    %cst_50 = arith.constant dense<0.000000e+00> : vector<8x32xf32>
    %109 = tpu.matmul %107, %108, %cst_50 {dimension_numbers = #tpu.dot_dimension_numbers<[1], [0], [0], [1], [0, 0, 1, 1], [], []>} : vector<8x16xf32>, vector<16x32xf32>, vector<8x32xf32> -> vector<8x32xf32>
    %c0_51 = arith.constant 0 : index
    %c0_52 = arith.constant 0 : index
    %110 = vector.load %arg6[%c0_51, %c0_52] : memref<1x32xf32, #tpu.memory_space<vmem>>, vector<1x32xf32>
    %111 = vector.broadcast %110 : vector<1x32xf32> to vector<8x32xf32>
    %112 = arith.addf %109, %111 : vector<8x32xf32>
    %113 = arith.addf %100, %112 : vector<8x32xf32>
    %c0_53 = arith.constant 0 : index
    %c0_54 = arith.constant 0 : index
    %114 = vector.load %arg9[%c0_53, %c0_54] : memref<1x32xf32, #tpu.memory_space<vmem>>, vector<1x32xf32>
    %c0_55 = arith.constant 0 : index
    %c0_56 = arith.constant 0 : index
    %115 = vector.load %arg10[%c0_55, %c0_56] : memref<1x32xf32, #tpu.memory_space<vmem>>, vector<1x32xf32>
    %cst_57 = arith.constant dense<0.000000e+00> : vector<8xf32>
    %116 = vector.multi_reduction <add>, %113, %cst_57 [1] : vector<8x32xf32> to vector<8xf32>
    %117 = vector.shape_cast %116 : vector<8xf32> to vector<8x1xf32>
    %cst_58 = arith.constant 3.200000e+01 : f32
    %118 = vector.broadcast %cst_58 : f32 to vector<8x1xf32>
    %119 = arith.divf %117, %118 : vector<8x1xf32>
    %120 = vector.broadcast %119 : vector<8x1xf32> to vector<8x32xf32>
    %121 = arith.subf %113, %120 : vector<8x32xf32>
    %122 = arith.mulf %121, %121 : vector<8x32xf32>
    %cst_59 = arith.constant dense<0.000000e+00> : vector<8xf32>
    %123 = vector.multi_reduction <add>, %122, %cst_59 [1] : vector<8x32xf32> to vector<8xf32>
    %124 = vector.shape_cast %123 : vector<8xf32> to vector<8x1xf32>
    %cst_60 = arith.constant 3.200000e+01 : f32
    %125 = vector.broadcast %cst_60 : f32 to vector<8x1xf32>
    %126 = arith.divf %124, %125 : vector<8x1xf32>
    %127 = vector.broadcast %119 : vector<8x1xf32> to vector<8x32xf32>
    %128 = arith.subf %113, %127 : vector<8x32xf32>
    %cst_61 = arith.constant 9.99999974E-6 : f32
    %129 = vector.broadcast %cst_61 : f32 to vector<8x1xf32>
    %130 = arith.addf %126, %129 : vector<8x1xf32>
    %131 = math.rsqrt %130 : vector<8x1xf32>
    %132 = vector.broadcast %131 : vector<8x1xf32> to vector<8x32xf32>
    %133 = arith.mulf %128, %132 : vector<8x32xf32>
    %134 = vector.broadcast %114 : vector<1x32xf32> to vector<8x32xf32>
    %135 = arith.mulf %133, %134 : vector<8x32xf32>
    %136 = vector.broadcast %115 : vector<1x32xf32> to vector<8x32xf32>
    %137 = arith.addf %135, %136 : vector<8x32xf32>
    %c0_62 = arith.constant 0 : index
    %c0_63 = arith.constant 0 : index
    %138 = vector.load %arg11[%c0_62, %c0_63] : memref<8x32xf32, #tpu.memory_space<vmem>>, vector<8x32xf32>
    tpu.vector_store %arg11[%c0_62, %c0_63], %137 {strides = array<i32>} : memref<8x32xf32, #tpu.memory_space<vmem>>, vector<8x32xf32>,
    return
  }
}

</mosaic_0001>

<llo_original>
// kernel: tpu_custom_call.1
$region0: #{tpu_custom_call.1}
  #allocation0 [shape = 'u32[]', space=smem, size = 0x4, offset = 0x4, fixed_abs, tag = 'smem constant byte address 0x4 - core index']
  #allocation1 [shape = 'u32[144,128]{1,0:T(1,128)}', space=vmem, size = 0x12000, scoped, tag = 'internal scratch']
  %s0 = inlined_call_operand.vmem [shape: f32[8,32], index: 0, kind: input, shape index: {}]
  %s1 = inlined_call_operand.hbm [shape: f32[32,384], index: 1, kind: input, shape index: {}]
  %s2 = inlined_call_operand.hbm [shape: f32[4,32,32], index: 2, kind: input, shape index: {}]
  %s3 = inlined_call_operand.vmem [shape: f32[32,16], index: 3, kind: input, shape index: {}]
  %s4 = inlined_call_operand.vmem [shape: f32[1,16], index: 4, kind: input, shape index: {}]
  %s5 = inlined_call_operand.vmem [shape: f32[16,32], index: 5, kind: input, shape index: {}]
  %s6 = inlined_call_operand.vmem [shape: f32[1,32], index: 6, kind: input, shape index: {}]
  %s7 = inlined_call_operand.vmem [shape: f32[1,32], index: 7, kind: input, shape index: {}]
  %s8 = inlined_call_operand.vmem [shape: f32[1,32], index: 8, kind: input, shape index: {}]
  %s9 = inlined_call_operand.vmem [shape: f32[1,32], index: 9, kind: input, shape index: {}]
  %s10 = inlined_call_operand.vmem [shape: f32[1,32], index: 10, kind: input, shape index: {}]
  %s11 = inlined_call_operand.hbm [shape: f32[8,32], index: 11, kind: output, shape index: {}]
  %s12 = sld [smem:[#allocation0]]
  $region62: #{tpu_custom_call.1} parent=0
    _
  %s14 = ssub.s32 1, %s12
  %s15 = scalar_select 0, %s14, %s12
  $region1: #{tpu_custom_call.1} parent=0
    #allocation2 [shape = 'u8[49152]{0}', space=vmem, size = 0xc000, scoped, tag = 'input window, operand 1, single buffered']
    #allocation3 [shape = 's32[1]{0}', space=sflag, size = 0x4, scoped, tag = 'scoped memory for tpu_custom_call.1']
    #allocation4 [shape = 's32[1]{0}', space=sflag, size = 0x4, scoped, tag = 'scoped memory for tpu_custom_call.1']
    #allocation5 [shape = 'u8[65536]{0}', space=vmem, size = 0x10000, scoped, tag = 'input window, operand 2, single buffered']
    #allocation6 [shape = 's32[1]{0}', space=sflag, size = 0x4, scoped, tag = 'scoped memory for tpu_custom_call.1']
    #allocation7 [shape = 'u8[4096]{0}', space=vmem, size = 0x1000, scoped, tag = 'output window, operand 0, single buffered']
    %16 = vsyncpa [#allocation3], 0
    %17 = vsyncpa [#allocation6], 0
    %18 = vsyncpa [#allocation4], 0
    // Predicated region
    $region2: #{tpu_custom_call.1} parent=1 // pred_check
      _
    $region3: #{tpu_custom_call.1} parent=1 // pred_check_branch
      %20 = sbr.rel (0) target = $region5
    $region4: #{tpu_custom_call.1} parent=1 // pred_region
      _
    $region5: #{tpu_custom_call.1} parent=1 // pred_fallthru
      _
    // Predicated region
    $region6: #{tpu_custom_call.1} parent=1 // pred_check
      _
    $region7: #{tpu_custom_call.1} parent=1 // pred_check_branch
      %22 = sbr.rel (0) target = $region9
    $region8: #{tpu_custom_call.1} parent=1 // pred_region
      %s24 = ssub.s32 1536, 1536
      %25 = vsyncadd [#allocation3], %s24
      %s26 = sshll.u32 [#allocation2], 4
      %s27 = int_to_ptr.vmem [resolvable:$true] %s26
      %32 = dma.hbm_to_vmem [thread:$0]  %s1, 1536, %s27, [#allocation3], 384, 384, 24
    $region9: #{tpu_custom_call.1} parent=1 // pred_fallthru
      _
    // Predicated region
    $region10: #{tpu_custom_call.1} parent=1 // pred_check
      _
    $region11: #{tpu_custom_call.1} parent=1 // pred_check_branch
      %34 = sbr.rel (0) target = $region13
    $region12: #{tpu_custom_call.1} parent=1 // pred_region
      %s36 = ssub.s32 2048, 2048
      %37 = vsyncadd [#allocation6], %s36
      %s38 = sshll.u32 [#allocation5], 4
      %s39 = int_to_ptr.vmem [resolvable:$true] %s38
      %44 = dma.hbm_to_vmem [thread:$0]  %s2, 2048, %s39, [#allocation6], 128, 128, 8
    $region13: #{tpu_custom_call.1} parent=1 // pred_fallthru
      _
    // Predicated region
    $region14: #{tpu_custom_call.1} parent=1 // pred_check
      _
    $region15: #{tpu_custom_call.1} parent=1 // pred_check_branch
      %46 = sbr.rel (0) target = $region17
    $region16: #{tpu_custom_call.1} parent=1 // pred_region
      _
    $region17: #{tpu_custom_call.1} parent=1 // pred_fallthru
      _
    // Predicated region
    $region18: #{tpu_custom_call.1} parent=1 // pred_check
      _
    $region19: #{tpu_custom_call.1} parent=1 // pred_check_branch
      %48 = sbr.rel (0) target = $region21
    $region20: #{tpu_custom_call.1} parent=1 // pred_region
      _
    $region21: #{tpu_custom_call.1} parent=1 // pred_fallthru
      _
    // Predicated region
    $region22: #{tpu_custom_call.1} parent=1 // pred_check
      _
    $region23: #{tpu_custom_call.1} parent=1 // pred_check_branch
      %50 = sbr.rel (0) target = $region25
    $region24: #{tpu_custom_call.1} parent=1 // pred_region
      _
    $region25: #{tpu_custom_call.1} parent=1 // pred_fallthru
      _
    // Predicated region
    $region26: #{tpu_custom_call.1} parent=1 // pred_check
      _
    $region27: #{tpu_custom_call.1} parent=1 // pred_check_branch
      %52 = sbr.rel (0) target = $region29
    $region28: #{tpu_custom_call.1} parent=1 // pred_region
      _
    $region29: #{tpu_custom_call.1} parent=1 // pred_fallthru
      _
    // Predicated region
    $region30: #{tpu_custom_call.1} parent=1 // pred_check
      _
    $region31: #{tpu_custom_call.1} parent=1 // pred_check_branch
      %54 = sbr.rel (0) target = $region33
    $region32: #{tpu_custom_call.1} parent=1 // pred_region
      _
    $region33: #{tpu_custom_call.1} parent=1 // pred_fallthru
      _
    // Predicated region
    $region34: #{tpu_custom_call.1} parent=1 // pred_check
      _
    $region35: #{tpu_custom_call.1} parent=1 // pred_check_branch
      %56 = sbr.rel (0) target = $region37
    $region36: #{tpu_custom_call.1} parent=1 // pred_region
      _
    $region37: #{tpu_custom_call.1} parent=1 // pred_fallthru
      _
    // Predicated region
    $region38: #{tpu_custom_call.1} parent=1 // pred_check
      _
    $region39: #{tpu_custom_call.1} parent=1 // pred_check_branch
      %58 = sbr.rel (0) target = $region41
    $region40: #{tpu_custom_call.1} parent=1 // pred_region
      _
    $region41: #{tpu_custom_call.1} parent=1 // pred_fallthru
      _
    // Predicated region
    $region42: #{tpu_custom_call.1} parent=1 // pred_check
      _
    $region43: #{tpu_custom_call.1} parent=1 // pred_check_branch
      %60 = sbr.rel (0) target = $region45
    $region44: #{tpu_custom_call.1} parent=1 // pred_region
      _
    $region45: #{tpu_custom_call.1} parent=1 // pred_fallthru
      _
    // Predicated region
    $region46: #{tpu_custom_call.1} parent=1 // pred_check
      _
    $region47: #{tpu_custom_call.1} parent=1 // pred_check_branch
      %62 = sbr.rel (0) target = $region49
    $region48: #{tpu_custom_call.1} parent=1 // pred_region
      %63 = dma.done [#allocation3], 1536
    $region49: #{tpu_custom_call.1} parent=1 // pred_fallthru
      _
    // Predicated region
    $region50: #{tpu_custom_call.1} parent=1 // pred_check
      _
    $region51: #{tpu_custom_call.1} parent=1 // pred_check_branch
      %65 = sbr.rel (0) target = $region53
    $region52: #{tpu_custom_call.1} parent=1 // pred_region
      %66 = dma.done [#allocation6], 2048
    $region53: #{tpu_custom_call.1} parent=1 // pred_fallthru
      _
    %v67 = vld [vmem:[%s0] sm:$0xff]
    %v68 = vld [vmem:[#allocation2] sm:$0xff]
    %v69 = vld [vmem:[#allocation2 + $0x8] sm:$0xff]
    %v70 = vld [vmem:[#allocation2 + $0x10] sm:$0xff]
    %v71 = vld [vmem:[#allocation2 + $0x18] sm:$0xff]
    %v72 = vld [vmem:[#allocation2 + $0x20] sm:$0xff]
    %v73 = vld [vmem:[#allocation2 + $0x28] sm:$0xff]
    %v74 = vld [vmem:[#allocation2 + $0x30] sm:$0xff]
    %v75 = vld [vmem:[#allocation2 + $0x38] sm:$0xff]
    %v76 = vld [vmem:[#allocation2 + $0x40] sm:$0xff]
    %v77 = vld [vmem:[#allocation2 + $0x48] sm:$0xff]
    %v78 = vld [vmem:[#allocation2 + $0x50] sm:$0xff]
    %v79 = vld [vmem:[#allocation2 + $0x58] sm:$0xff]
    %vm80 = vcmask 261120
    %v82 = vsel %vm80, %v67, 0
    %84 = vmatprep.subr.mxu0 %v69
    %85 = vmatpush1.msra.mxu0 %v68
    %86 = vmatprep.subr.mxu0 %v72
    %87 = vmatpush1.msra.mxu0 %v71
    %88 = vmatprep.subr.mxu0 %v75
    %89 = vmatpush1.msra.mxu0 %v74
    %90 = vmatprep.subr.mxu0 %v78
    %91 = vmatpush1.msra.mxu0 %v77
    %92 = vmatprep.subr.mxu0 0.0
    %93 = vmatpush1.msra.mxu0 0.0
    %94 = vmatprep.subr.mxu0 0.0
    %95 = vmatpush1.msra.mxu0 0.0
    %96 = vmatprep.subr.mxu0 0.0
    %97 = vmatpush1.msra.mxu0 0.0
    %98 = vmatprep.subr.mxu0 0.0
    %99 = vmatpush1.msra.mxu0 0.0
    %100 = vmatprep.subr.mxu0 0.0
    %101 = vmatpush1.msra.mxu0 0.0
    %102 = vmatprep.subr.mxu0 0.0
    %103 = vmatpush1.msra.mxu0 0.0
    %104 = vmatprep.subr.mxu0 0.0
    %105 = vmatpush1.msra.mxu0 0.0
    %106 = vmatprep.subr.mxu0 0.0
    %107 = vmatpush1.msra.mxu0 0.0
    %108 = vmatprep.subr.mxu0 0.0
    %109 = vmatpush1.msra.mxu0 0.0
    %110 = vmatprep.subr.mxu0 0.0
    %111 = vmatpush1.msra.mxu0 0.0
    %112 = vmatprep.subr.mxu0 0.0
    %113 = vmatpush1.msra.mxu0 0.0
    %114 = vmatprep.subr.mxu0 0.0
    %115 = vmatpush1.msra.mxu0 0.0
    %116 = vmatprep.subr.mxu0 0.0
    %117 = vmatpush1.msra.mxu0 0.0
    %118 = vmatprep.subr.mxu0 0.0
    %119 = vmatpush1.msra.mxu0 0.0
    %120 = vmatprep.subr.mxu0 0.0
    %121 = vmatpush1.msra.mxu0 0.0
    %122 = vmatprep.subr.mxu0 0.0
    %123 = vmatpush1.msra.mxu0 0.0
    %124 = vmatprep.subr.mxu0 0.0
    %125 = vmatpush1.msra.mxu0 0.0
    %126 = vmatprep.subr.mxu0 0.0
    %127 = vmatpush1.msra.mxu0 0.0
    %128 = vmatprep.subr.mxu0 0.0
    %129 = vmatpush1.msra.mxu0 0.0
    %130 = vmatprep.subr.mxu0 0.0
    %131 = vmatpush1.msra.mxu0 0.0
    %132 = vmatprep.subr.mxu0 0.0
    %133 = vmatpush1.msra.mxu0 0.0
    %134 = vmatprep.subr.mxu0 0.0
    %135 = vmatpush1.msra.mxu0 0.0
    %136 = vmatprep.subr.mxu0 0.0
    %137 = vmatpush1.msra.mxu0 0.0
    %138 = vmatprep.subr.mxu0 0.0
    %139 = vmatpush1.msra.mxu0 0.0
    %140 = vmatprep.subr.mxu0 0.0
    %141 = vmatpush1.msra.mxu0 0.0
    %142 = vmatprep.subr.mxu0 0.0
    %143 = vmatpush1.msra.mxu0 0.0
    %144 = vmatprep.subr.mxu0 0.0
    %145 = vmatpush1.msra.mxu0 0.0
    %146 = vmatprep.subr.mxu0 0.0
    %147 = vmatpush1.msra.mxu0 0.0
    %148 = vmatprep.mubr.f32.mxu0 0.0
    %149 = vmatmul.mubr.f32.gmra.mrb[0].mxu0 %v82
    %v150 = vpop.f32.mrb[0].mxu0
    %v151 = vadd.f32 0.0, %v150
    %v152 = vpop.f32.mrb[0].mxu0
    %v153 = vadd.f32 0.0, %v152
    %154 = vdwg.mxu0
    %155 = vmatprep.subr.mxu0 0.0
    %156 = vmatpush1.msra.mxu0 %v70
    %157 = vmatprep.subr.mxu0 0.0
    %158 = vmatpush1.msra.mxu0 %v73
    %159 = vmatprep.subr.mxu0 0.0
    %160 = vmatpush1.msra.mxu0 %v76
    %161 = vmatprep.subr.mxu0 0.0
    %162 = vmatpush1.msra.mxu0 %v79
    %163 = vmatprep.subr.mxu0 0.0
    %164 = vmatpush1.msra.mxu0 0.0
    %165 = vmatprep.subr.mxu0 0.0
    %166 = vmatpush1.msra.mxu0 0.0
    %167 = vmatprep.subr.mxu0 0.0
    %168 = vmatpush1.msra.mxu0 0.0
    %169 = vmatprep.subr.mxu0 0.0
    %170 = vmatpush1.msra.mxu0 0.0
    %171 = vmatprep.subr.mxu0 0.0
    %172 = vmatpush1.msra.mxu0 0.0
    %173 = vmatprep.subr.mxu0 0.0
    %174 = vmatpush1.msra.mxu0 0.0
    %175 = vmatprep.subr.mxu0 0.0
    %176 = vmatpush1.msra.mxu0 0.0
    %177 = vmatprep.subr.mxu0 0.0
    %178 = vmatpush1.msra.mxu0 0.0
    %179 = vmatprep.subr.mxu0 0.0
    %180 = vmatpush1.msra.mxu0 0.0
    %181 = vmatprep.subr.mxu0 0.0
    %182 = vmatpush1.msra.mxu0 0.0
    %183 = vmatprep.subr.mxu0 0.0
    %184 = vmatpush1.msra.mxu0 0.0
    %185 = vmatprep.subr.mxu0 0.0
    %186 = vmatpush1.msra.mxu0 0.0
    %187 = vmatprep.subr.mxu0 0.0
    %188 = vmatpush1.msra.mxu0 0.0
    %189 = vmatprep.subr.mxu0 0.0
    %190 = vmatpush1.msra.mxu0 0.0
    %191 = vmatprep.subr.mxu0 0.0
    %192 = vmatpush1.msra.mxu0 0.0
    %193 = vmatprep.subr.mxu0 0.0
    %194 = vmatpush1.msra.mxu0 0.0
    %195 = vmatprep.subr.mxu0 0.0
    %196 = vmatpush1.msra.mxu0 0.0
    %197 = vmatprep.subr.mxu0 0.0
    %198 = vmatpush1.msra.mxu0 0.0
    %199 = vmatprep.subr.mxu0 0.0
    %200 = vmatpush1.msra.mxu0 0.0
    %201 = vmatprep.subr.mxu0 0.0
    %202 = vmatpush1.msra.mxu0 0.0
    %203 = vmatprep.subr.mxu0 0.0
    %204 = vmatpush1.msra.mxu0 0.0
    %205 = vmatprep.subr.mxu0 0.0
    %206 = vmatpush1.msra.mxu0 0.0
    %207 = vmatprep.subr.mxu0 0.0
    %208 = vmatpush1.msra.mxu0 0.0
    %209 = vmatprep.subr.mxu0 0.0
    %210 = vmatpush1.msra.mxu0 0.0
    %211 = vmatprep.subr.mxu0 0.0
    %212 = vmatpush1.msra.mxu0 0.0
    %213 = vmatprep.subr.mxu0 0.0
    %214 = vmatpush1.msra.mxu0 0.0
    %215 = vmatprep.subr.mxu0 0.0
    %216 = vmatpush1.msra.mxu0 0.0
    %217 = vmatprep.subr.mxu0 0.0
    %218 = vmatpush1.msra.mxu0 0.0
    %219 = vmatprep.mubr.f32.mxu0 0.0
    %220 = vmatmul.mubr.f32.gmra.mrb[0].mxu0 %v82
    %v221 = vpop.f32.mrb[0].mxu0
    %v222 = vadd.f32 0.0, %v221
    %v223 = vpop.f32.mrb[0].mxu0
    %224 = vdwg.mxu0
    %v226 = vsel %vm80, %v151, 0
    %v229 = vsel %vm80, %v153, 0
    %231 = vmatprep.subr.mxu0 0.0
    %232 = vmatpush1.xpose.msra.mxu0 %v229
    %233 = vmatprep.subr.mxu0 0.0
    %234 = vmatpush1.xpose.msra.mxu0 0.0
    %235 = vmatprep.subr.mxu0 0.0
    %236 = vmatpush1.xpose.msra.mxu0 0.0
    %237 = vmatprep.subr.mxu0 0.0
    %238 = vmatpush1.xpose.msra.mxu0 0.0
    %239 = vmatprep.subr.mxu0 0.0
    %240 = vmatpush1.xpose.msra.mxu0 0.0
    %241 = vmatprep.subr.mxu0 0.0
    %242 = vmatpush1.xpose.msra.mxu0 0.0
    %243 = vmatprep.subr.mxu0 0.0
    %244 = vmatpush1.xpose.msra.mxu0 0.0
    %245 = vmatprep.subr.mxu0 0.0
    %246 = vmatpush1.xpose.msra.mxu0 0.0
    %247 = vmatprep.subr.mxu0 0.0
    %248 = vmatpush1.xpose.msra.mxu0 0.0
    %249 = vmatprep.subr.mxu0 0.0
    %250 = vmatpush1.xpose.msra.mxu0 0.0
    %251 = vmatprep.subr.mxu0 0.0
    %252 = vmatpush1.xpose.msra.mxu0 0.0
    %253 = vmatprep.subr.mxu0 0.0
    %254 = vmatpush1.xpose.msra.mxu0 0.0
    %255 = vmatprep.subr.mxu0 0.0
    %256 = vmatpush1.xpose.msra.mxu0 0.0
    %257 = vmatprep.subr.mxu0 0.0
    %258 = vmatpush1.xpose.msra.mxu0 0.0
    %259 = vmatprep.subr.mxu0 0.0
    %260 = vmatpush1.xpose.msra.mxu0 0.0
    %261 = vmatprep.subr.mxu0 0.0
    %262 = vmatpush1.xpose.msra.mxu0 0.0
    %263 = vmatprep.subr.mxu0 0.0
    %264 = vmatpush1.xpose.msra.mxu0 0.0
    %265 = vmatprep.subr.mxu0 0.0
    %266 = vmatpush1.xpose.msra.mxu0 0.0
    %267 = vmatprep.subr.mxu0 0.0
    %268 = vmatpush1.xpose.msra.mxu0 0.0
    %269 = vmatprep.subr.mxu0 0.0
    %270 = vmatpush1.xpose.msra.mxu0 0.0
    %271 = vmatprep.subr.mxu0 0.0
    %272 = vmatpush1.xpose.msra.mxu0 0.0
    %273 = vmatprep.subr.mxu0 0.0
    %274 = vmatpush1.xpose.msra.mxu0 0.0
    %275 = vmatprep.subr.mxu0 0.0
    %276 = vmatpush1.xpose.msra.mxu0 0.0
    %277 = vmatprep.subr.mxu0 0.0
    %278 = vmatpush1.xpose.msra.mxu0 0.0
    %279 = vmatprep.subr.mxu0 0.0
    %280 = vmatpush1.xpose.msra.mxu0 0.0
    %281 = vmatprep.subr.mxu0 0.0
    %282 = vmatpush1.xpose.msra.mxu0 0.0
    %283 = vmatprep.subr.mxu0 0.0
    %284 = vmatpush1.xpose.msra.mxu0 0.0
    %285 = vmatprep.subr.mxu0 0.0
    %286 = vmatpush1.xpose.msra.mxu0 0.0
    %287 = vmatprep.subr.mxu0 0.0
    %288 = vmatpush1.xpose.msra.mxu0 0.0
    %289 = vmatprep.subr.mxu0 0.0
    %290 = vmatpush1.xpose.msra.mxu0 0.0
    %291 = vmatprep.subr.mxu0 0.0
    %292 = vmatpush1.xpose.msra.mxu0 0.0
    %293 = vmatprep.subr.mxu0 0.0
    %294 = vmatpush1.xpose.msra.mxu0 0.0
    %295 = vmatprep.mubr.f32.mxu0 0.0
    %296 = vmatmul.mubr.f32.gmra.mrb[0].mxu0 %v226
    %v297 = vpop.f32.mrb[0].mxu0
    %v298 = vadd.f32 0.0, %v297
    %v299 = vpop.f32.mrb[0].mxu0
    %300 = vdwg.mxu0
    %vm301 = vcmask 64512
    %v302 = vsel %vm301, %v298, -inf
    %303 = vmax.xlane.f32.xlu0 %v302
    %v304 = vpop.xlane.xlu0 %303
    %v305 = vsub.f32 %v298, %v304
    %v306 = vmul.f32 %v305, 1.442695
    %v307 = vpow.pop %v306
    %v308 = vsel %vm301, %v307, 0.0
    %309 = vadd.xlane.f32.xlu0 %v308
    %v310 = vpop.xlane.xlu0 %309
    %v311 = vrcp.pop %v310
    %v312 = vmul.f32 %v307, %v311
    %v314 = vsel %vm301, %v312, 0
    %316 = vmatprep.subr.mxu0 0.0
    %317 = vmatpush1.msra.mxu0 %v222
    %318 = vmatprep.subr.mxu0 0.0
    %319 = vmatpush1.msra.mxu0 0.0
    %320 = vmatprep.subr.mxu0 0.0
    %321 = vmatpush1.msra.mxu0 0.0
    %322 = vmatprep.subr.mxu0 0.0
    %323 = vmatpush1.msra.mxu0 0.0
    %324 = vmatprep.subr.mxu0 0.0
    %325 = vmatpush1.msra.mxu0 0.0
    %326 = vmatprep.subr.mxu0 0.0
    %327 = vmatpush1.msra.mxu0 0.0
    %328 = vmatprep.subr.mxu0 0.0
    %329 = vmatpush1.msra.mxu0 0.0
    %330 = vmatprep.subr.mxu0 0.0
    %331 = vmatpush1.msra.mxu0 0.0
    %332 = vmatprep.subr.mxu0 0.0
    %333 = vmatpush1.msra.mxu0 0.0
    %334 = vmatprep.subr.mxu0 0.0
    %335 = vmatpush1.msra.mxu0 0.0
    %336 = vmatprep.subr.mxu0 0.0
    %337 = vmatpush1.msra.mxu0 0.0
    %338 = vmatprep.subr.mxu0 0.0
    %339 = vmatpush1.msra.mxu0 0.0
    %340 = vmatprep.subr.mxu0 0.0
    %341 = vmatpush1.msra.mxu0 0.0
    %342 = vmatprep.subr.mxu0 0.0
    %343 = vmatpush1.msra.mxu0 0.0
    %344 = vmatprep.subr.mxu0 0.0
    %345 = vmatpush1.msra.mxu0 0.0
    %346 = vmatprep.subr.mxu0 0.0
    %347 = vmatpush1.msra.mxu0 0.0
    %348 = vmatprep.subr.mxu0 0.0
    %349 = vmatpush1.msra.mxu0 0.0
    %350 = vmatprep.subr.mxu0 0.0
    %351 = vmatpush1.msra.mxu0 0.0
    %352 = vmatprep.subr.mxu0 0.0
    %353 = vmatpush1.msra.mxu0 0.0
    %354 = vmatprep.subr.mxu0 0.0
    %355 = vmatpush1.msra.mxu0 0.0
    %356 = vmatprep.subr.mxu0 0.0
    %357 = vmatpush1.msra.mxu0 0.0
    %358 = vmatprep.subr.mxu0 0.0
    %359 = vmatpush1.msra.mxu0 0.0
    %360 = vmatprep.subr.mxu0 0.0
    %361 = vmatpush1.msra.mxu0 0.0
    %362 = vmatprep.subr.mxu0 0.0
    %363 = vmatpush1.msra.mxu0 0.0
    %364 = vmatprep.subr.mxu0 0.0
    %365 = vmatpush1.msra.mxu0 0.0
    %366 = vmatprep.subr.mxu0 0.0
    %367 = vmatpush1.msra.mxu0 0.0
    %368 = vmatprep.subr.mxu0 0.0
    %369 = vmatpush1.msra.mxu0 0.0
    %370 = vmatprep.subr.mxu0 0.0
    %371 = vmatpush1.msra.mxu0 0.0
    %372 = vmatprep.subr.mxu0 0.0
    %373 = vmatpush1.msra.mxu0 0.0
    %374 = vmatprep.subr.mxu0 0.0
    %375 = vmatpush1.msra.mxu0 0.0
    %376 = vmatprep.subr.mxu0 0.0
    %377 = vmatpush1.msra.mxu0 0.0
    %378 = vmatprep.subr.mxu0 0.0
    %379 = vmatpush1.msra.mxu0 0.0
    %380 = vmatprep.mubr.f32.mxu0 0.0
    %381 = vmatmul.mubr.f32.gmra.mrb[0].mxu0 %v314
    %v382 = vpop.f32.mrb[0].mxu0
    %v383 = vadd.f32 0.0, %v382
    %v384 = vpop.f32.mrb[0].mxu0
    %385 = vdwg.mxu0
    %v386 = vld [vmem:[#allocation5] sm:$0xff]
    %v387 = vld [vmem:[#allocation5 + $0x8] sm:$0xff]
    %v388 = vld [vmem:[#allocation5 + $0x10] sm:$0xff]
    %v389 = vld [vmem:[#allocation5 + $0x18] sm:$0xff]
    %390 = vrot.lane.b32.xlu0 %v151, 96
    %v391 = vpop.permute.xlu0 %390
    %392 = vrot.lane.b32.xlu0 %v153, 96
    %v393 = vpop.permute.xlu0 %392
    %v394 = vsel %vm80, %v391, 0
    %v396 = vsel %vm80, %v393, 0
    %398 = vmatprep.subr.mxu0 0.0
    %399 = vmatpush1.xpose.msra.mxu0 %v396
    %400 = vmatprep.subr.mxu0 0.0
    %401 = vmatpush1.xpose.msra.mxu0 0.0
    %402 = vmatprep.subr.mxu0 0.0
    %403 = vmatpush1.xpose.msra.mxu0 0.0
    %404 = vmatprep.subr.mxu0 0.0
    %405 = vmatpush1.xpose.msra.mxu0 0.0
    %406 = vmatprep.subr.mxu0 0.0
    %407 = vmatpush1.xpose.msra.mxu0 0.0
    %408 = vmatprep.subr.mxu0 0.0
    %409 = vmatpush1.xpose.msra.mxu0 0.0
    %410 = vmatprep.subr.mxu0 0.0
    %411 = vmatpush1.xpose.msra.mxu0 0.0
    %412 = vmatprep.subr.mxu0 0.0
    %413 = vmatpush1.xpose.msra.mxu0 0.0
    %414 = vmatprep.subr.mxu0 0.0
    %415 = vmatpush1.xpose.msra.mxu0 0.0
    %416 = vmatprep.subr.mxu0 0.0
    %417 = vmatpush1.xpose.msra.mxu0 0.0
    %418 = vmatprep.subr.mxu0 0.0
    %419 = vmatpush1.xpose.msra.mxu0 0.0
    %420 = vmatprep.subr.mxu0 0.0
    %421 = vmatpush1.xpose.msra.mxu0 0.0
    %422 = vmatprep.subr.mxu0 0.0
    %423 = vmatpush1.xpose.msra.mxu0 0.0
    %424 = vmatprep.subr.mxu0 0.0
    %425 = vmatpush1.xpose.msra.mxu0 0.0
    %426 = vmatprep.subr.mxu0 0.0
    %427 = vmatpush1.xpose.msra.mxu0 0.0
    %428 = vmatprep.subr.mxu0 0.0
    %429 = vmatpush1.xpose.msra.mxu0 0.0
    %430 = vmatprep.subr.mxu0 0.0
    %431 = vmatpush1.xpose.msra.mxu0 0.0
    %432 = vmatprep.subr.mxu0 0.0
    %433 = vmatpush1.xpose.msra.mxu0 0.0
    %434 = vmatprep.subr.mxu0 0.0
    %435 = vmatpush1.xpose.msra.mxu0 0.0
    %436 = vmatprep.subr.mxu0 0.0
    %437 = vmatpush1.xpose.msra.mxu0 0.0
    %438 = vmatprep.subr.mxu0 0.0
    %439 = vmatpush1.xpose.msra.mxu0 0.0
    %440 = vmatprep.subr.mxu0 0.0
    %441 = vmatpush1.xpose.msra.mxu0 0.0
    %442 = vmatprep.subr.mxu0 0.0
    %443 = vmatpush1.xpose.msra.mxu0 0.0
    %444 = vmatprep.subr.mxu0 0.0
    %445 = vmatpush1.xpose.msra.mxu0 0.0
    %446 = vmatprep.subr.mxu0 0.0
    %447 = vmatpush1.xpose.msra.mxu0 0.0
    %448 = vmatprep.subr.mxu0 0.0
    %449 = vmatpush1.xpose.msra.mxu0 0.0
    %450 = vmatprep.subr.mxu0 0.0
    %451 = vmatpush1.xpose.msra.mxu0 0.0
    %452 = vmatprep.subr.mxu0 0.0
    %453 = vmatpush1.xpose.msra.mxu0 0.0
    %454 = vmatprep.subr.mxu0 0.0
    %455 = vmatpush1.xpose.msra.mxu0 0.0
    %456 = vmatprep.subr.mxu0 0.0
    %457 = vmatpush1.xpose.msra.mxu0 0.0
    %458 = vmatprep.subr.mxu0 0.0
    %459 = vmatpush1.xpose.msra.mxu0 0.0
    %460 = vmatprep.subr.mxu0 0.0
    %461 = vmatpush1.xpose.msra.mxu0 0.0
    %462 = vmatprep.mubr.f32.mxu0 0.0
    %463 = vmatmul.mubr.f32.gmra.mrb[0].mxu0 %v394
    %v464 = vpop.f32.mrb[0].mxu0
    %v465 = vadd.f32 0.0, %v464
    %v466 = vpop.f32.mrb[0].mxu0
    %467 = vdwg.mxu0
    %v468 = vsel %vm301, %v465, -inf
    %469 = vmax.xlane.f32.xlu0 %v468
    %v470 = vpop.xlane.xlu0 %469
    %v471 = vsub.f32 %v465, %v470
    %v472 = vmul.f32 %v471, 1.442695
    %v473 = vpow.pop %v472
    %v474 = vsel %vm301, %v473, 0.0
    %475 = vadd.xlane.f32.xlu0 %v474
    %v476 = vpop.xlane.xlu0 %475
    %v477 = vrcp.pop %v476
    %v478 = vmul.f32 %v473, %v477
    %480 = vrot.lane.b32.xlu0 %v222, 96
    %v481 = vpop.permute.xlu0 %480
    %v484 = vsel %vm301, %v478, 0
    %486 = vmatprep.subr.mxu0 0.0
    %487 = vmatpush1.msra.mxu0 %v481
    %488 = vmatprep.subr.mxu0 0.0
    %489 = vmatpush1.msra.mxu0 0.0
    %490 = vmatprep.subr.mxu0 0.0
    %491 = vmatpush1.msra.mxu0 0.0
    %492 = vmatprep.subr.mxu0 0.0
    %493 = vmatpush1.msra.mxu0 0.0
    %494 = vmatprep.subr.mxu0 0.0
    %495 = vmatpush1.msra.mxu0 0.0
    %496 = vmatprep.subr.mxu0 0.0
    %497 = vmatpush1.msra.mxu0 0.0
    %498 = vmatprep.subr.mxu0 0.0
    %499 = vmatpush1.msra.mxu0 0.0
    %500 = vmatprep.subr.mxu0 0.0
    %501 = vmatpush1.msra.mxu0 0.0
    %502 = vmatprep.subr.mxu0 0.0
    %503 = vmatpush1.msra.mxu0 0.0
    %504 = vmatprep.subr.mxu0 0.0
    %505 = vmatpush1.msra.mxu0 0.0
    %506 = vmatprep.subr.mxu0 0.0
    %507 = vmatpush1.msra.mxu0 0.0
    %508 = vmatprep.subr.mxu0 0.0
    %509 = vmatpush1.msra.mxu0 0.0
    %510 = vmatprep.subr.mxu0 0.0
    %511 = vmatpush1.msra.mxu0 0.0
    %512 = vmatprep.subr.mxu0 0.0
    %513 = vmatpush1.msra.mxu0 0.0
    %514 = vmatprep.subr.mxu0 0.0
    %515 = vmatpush1.msra.mxu0 0.0
    %516 = vmatprep.subr.mxu0 0.0
    %517 = vmatpush1.msra.mxu0 0.0
    %518 = vmatprep.subr.mxu0 0.0
    %519 = vmatpush1.msra.mxu0 0.0
    %520 = vmatprep.subr.mxu0 0.0
    %521 = vmatpush1.msra.mxu0 0.0
    %522 = vmatprep.subr.mxu0 0.0
    %523 = vmatpush1.msra.mxu0 0.0
    %524 = vmatprep.subr.mxu0 0.0
    %525 = vmatpush1.msra.mxu0 0.0
    %526 = vmatprep.subr.mxu0 0.0
    %527 = vmatpush1.msra.mxu0 0.0
    %528 = vmatprep.subr.mxu0 0.0
    %529 = vmatpush1.msra.mxu0 0.0
    %530 = vmatprep.subr.mxu0 0.0
    %531 = vmatpush1.msra.mxu0 0.0
    %532 = vmatprep.subr.mxu0 0.0
    %533 = vmatpush1.msra.mxu0 0.0
    %534 = vmatprep.subr.mxu0 0.0
    %535 = vmatpush1.msra.mxu0 0.0
    %536 = vmatprep.subr.mxu0 0.0
    %537 = vmatpush1.msra.mxu0 0.0
    %538 = vmatprep.subr.mxu0 0.0
    %539 = vmatpush1.msra.mxu0 0.0
    %540 = vmatprep.subr.mxu0 0.0
    %541 = vmatpush1.msra.mxu0 0.0
    %542 = vmatprep.subr.mxu0 0.0
    %543 = vmatpush1.msra.mxu0 0.0
    %544 = vmatprep.subr.mxu0 0.0
    %545 = vmatpush1.msra.mxu0 0.0
    %546 = vmatprep.subr.mxu0 0.0
    %547 = vmatpush1.msra.mxu0 0.0
    %548 = vmatprep.subr.mxu0 0.0
    %549 = vmatpush1.msra.mxu0 0.0
    %550 = vmatprep.mubr.f32.mxu0 0.0
    %551 = vmatmul.mubr.f32.gmra.mrb[0].mxu0 %v484
    %v552 = vpop.f32.mrb[0].mxu0
    %v553 = vadd.f32 0.0, %v552
    %v554 = vpop.f32.mrb[0].mxu0
    %555 = vdwg.mxu0
    %s556 = scalar_lea.vmem [#allocation5], 32
    %v557 = vld [vmem:[%s556] sm:$0xff]
    %v558 = vld [vmem:[%s556 + $0x8] sm:$0xff]
    %v559 = vld [vmem:[%s556 + $0x10] sm:$0xff]
    %v560 = vld [vmem:[%s556 + $0x18] sm:$0xff]
    %v562 = vsel %vm80, %v553, 0
    %564 = vmatprep.subr.mxu0 0.0
    %565 = vmatpush1.msra.mxu0 %v557
    %566 = vmatprep.subr.mxu0 0.0
    %567 = vmatpush1.msra.mxu0 %v558
    %568 = vmatprep.subr.mxu0 0.0
    %569 = vmatpush1.msra.mxu0 %v559
    %570 = vmatprep.subr.mxu0 0.0
    %571 = vmatpush1.msra.mxu0 %v560
    %572 = vmatprep.subr.mxu0 0.0
    %573 = vmatpush1.msra.mxu0 0.0
    %574 = vmatprep.subr.mxu0 0.0
    %575 = vmatpush1.msra.mxu0 0.0
    %576 = vmatprep.subr.mxu0 0.0
    %577 = vmatpush1.msra.mxu0 0.0
    %578 = vmatprep.subr.mxu0 0.0
    %579 = vmatpush1.msra.mxu0 0.0
    %580 = vmatprep.subr.mxu0 0.0
    %581 = vmatpush1.msra.mxu0 0.0
    %582 = vmatprep.subr.mxu0 0.0
    %583 = vmatpush1.msra.mxu0 0.0
    %584 = vmatprep.subr.mxu0 0.0
    %585 = vmatpush1.msra.mxu0 0.0
    %586 = vmatprep.subr.mxu0 0.0
    %587 = vmatpush1.msra.mxu0 0.0
    %588 = vmatprep.subr.mxu0 0.0
    %589 = vmatpush1.msra.mxu0 0.0
    %590 = vmatprep.subr.mxu0 0.0
    %591 = vmatpush1.msra.mxu0 0.0
    %592 = vmatprep.subr.mxu0 0.0
    %593 = vmatpush1.msra.mxu0 0.0
    %594 = vmatprep.subr.mxu0 0.0
    %595 = vmatpush1.msra.mxu0 0.0
    %596 = vmatprep.subr.mxu0 0.0
    %597 = vmatpush1.msra.mxu0 0.0
    %598 = vmatprep.subr.mxu0 0.0
    %599 = vmatpush1.msra.mxu0 0.0
    %600 = vmatprep.subr.mxu0 0.0
    %601 = vmatpush1.msra.mxu0 0.0
    %602 = vmatprep.subr.mxu0 0.0
    %603 = vmatpush1.msra.mxu0 0.0
    %604 = vmatprep.subr.mxu0 0.0
    %605 = vmatpush1.msra.mxu0 0.0
    %606 = vmatprep.subr.mxu0 0.0
    %607 = vmatpush1.msra.mxu0 0.0
    %608 = vmatprep.subr.mxu0 0.0
    %609 = vmatpush1.msra.mxu0 0.0
    %610 = vmatprep.subr.mxu0 0.0
    %611 = vmatpush1.msra.mxu0 0.0
    %612 = vmatprep.subr.mxu0 0.0
    %613 = vmatpush1.msra.mxu0 0.0
    %614 = vmatprep.subr.mxu0 0.0
    %615 = vmatpush1.msra.mxu0 0.0
    %616 = vmatprep.subr.mxu0 0.0
    %617 = vmatpush1.msra.mxu0 0.0
    %618 = vmatprep.subr.mxu0 0.0
    %619 = vmatpush1.msra.mxu0 0.0
    %620 = vmatprep.subr.mxu0 0.0
    %621 = vmatpush1.msra.mxu0 0.0
    %622 = vmatprep.subr.mxu0 0.0
    %623 = vmatpush1.msra.mxu0 0.0
    %624 = vmatprep.subr.mxu0 0.0
    %625 = vmatpush1.msra.mxu0 0.0
    %626 = vmatprep.subr.mxu0 0.0
    %627 = vmatpush1.msra.mxu0 0.0
    %628 = vmatprep.mubr.f32.mxu0 0.0
    %629 = vmatmul.mubr.f32.gmra.mrb[0].mxu0 %v562
    %v630 = vpop.f32.mrb[0].mxu0
    %v631 = vadd.f32 0.0, %v630
    %v632 = vpop.f32.mrb[0].mxu0
    %633 = vdwg.mxu0
    %v635 = vsel %vm80, %v383, 0
    %637 = vmatprep.subr.mxu0 0.0
    %638 = vmatpush1.msra.mxu0 %v386
    %639 = vmatprep.subr.mxu0 0.0
    %640 = vmatpush1.msra.mxu0 %v387
    %641 = vmatprep.subr.mxu0 0.0
    %642 = vmatpush1.msra.mxu0 %v388
    %643 = vmatprep.subr.mxu0 0.0
    %644 = vmatpush1.msra.mxu0 %v389
    %645 = vmatprep.subr.mxu0 0.0
    %646 = vmatpush1.msra.mxu0 0.0
    %647 = vmatprep.subr.mxu0 0.0
    %648 = vmatpush1.msra.mxu0 0.0
    %649 = vmatprep.subr.mxu0 0.0
    %650 = vmatpush1.msra.mxu0 0.0
    %651 = vmatprep.subr.mxu0 0.0
    %652 = vmatpush1.msra.mxu0 0.0
    %653 = vmatprep.subr.mxu0 0.0
    %654 = vmatpush1.msra.mxu0 0.0
    %655 = vmatprep.subr.mxu0 0.0
    %656 = vmatpush1.msra.mxu0 0.0
    %657 = vmatprep.subr.mxu0 0.0
    %658 = vmatpush1.msra.mxu0 0.0
    %659 = vmatprep.subr.mxu0 0.0
    %660 = vmatpush1.msra.mxu0 0.0
    %661 = vmatprep.subr.mxu0 0.0
    %662 = vmatpush1.msra.mxu0 0.0
    %663 = vmatprep.subr.mxu0 0.0
    %664 = vmatpush1.msra.mxu0 0.0
    %665 = vmatprep.subr.mxu0 0.0
    %666 = vmatpush1.msra.mxu0 0.0
    %667 = vmatprep.subr.mxu0 0.0
    %668 = vmatpush1.msra.mxu0 0.0
    %669 = vmatprep.subr.mxu0 0.0
    %670 = vmatpush1.msra.mxu0 0.0
    %671 = vmatprep.subr.mxu0 0.0
    %672 = vmatpush1.msra.mxu0 0.0
    %673 = vmatprep.subr.mxu0 0.0
    %674 = vmatpush1.msra.mxu0 0.0
    %675 = vmatprep.subr.mxu0 0.0
    %676 = vmatpush1.msra.mxu0 0.0
    %677 = vmatprep.subr.mxu0 0.0
    %678 = vmatpush1.msra.mxu0 0.0
    %679 = vmatprep.subr.mxu0 0.0
    %680 = vmatpush1.msra.mxu0 0.0
    %681 = vmatprep.subr.mxu0 0.0
    %682 = vmatpush1.msra.mxu0 0.0
    %683 = vmatprep.subr.mxu0 0.0
    %684 = vmatpush1.msra.mxu0 0.0
    %685 = vmatprep.subr.mxu0 0.0
    %686 = vmatpush1.msra.mxu0 0.0
    %687 = vmatprep.subr.mxu0 0.0
    %688 = vmatpush1.msra.mxu0 0.0
    %689 = vmatprep.subr.mxu0 0.0
    %690 = vmatpush1.msra.mxu0 0.0
    %691 = vmatprep.subr.mxu0 0.0
    %692 = vmatpush1.msra.mxu0 0.0
    %693 = vmatprep.subr.mxu0 0.0
    %694 = vmatpush1.msra.mxu0 0.0
    %695 = vmatprep.subr.mxu0 0.0
    %696 = vmatpush1.msra.mxu0 0.0
    %697 = vmatprep.subr.mxu0 0.0
    %698 = vmatpush1.msra.mxu0 0.0
    %699 = vmatprep.subr.mxu0 0.0
    %700 = vmatpush1.msra.mxu0 0.0
    %701 = vmatprep.mubr.f32.mxu0 0.0
    %702 = vmatmul.mubr.f32.gmra.mrb[0].mxu0 %v635
    %v703 = vpop.f32.mrb[0].mxu0
    %v704 = vadd.f32 %v631, %v703
    %v705 = vpop.f32.mrb[0].mxu0
    %706 = vdwg.mxu0
    %707 = vrot.lane.b32.xlu0 %v151, 64
    %v708 = vpop.permute.xlu0 %707
    %709 = vrot.lane.b32.xlu0 %v153, 64
    %v710 = vpop.permute.xlu0 %709
    %v711 = vsel %vm80, %v708, 0
    %v713 = vsel %vm80, %v710, 0
    %715 = vmatprep.subr.mxu0 0.0
    %716 = vmatpush1.xpose.msra.mxu0 %v713
    %717 = vmatprep.subr.mxu0 0.0
    %718 = vmatpush1.xpose.msra.mxu0 0.0
    %719 = vmatprep.subr.mxu0 0.0
    %720 = vmatpush1.xpose.msra.mxu0 0.0
    %721 = vmatprep.subr.mxu0 0.0
    %722 = vmatpush1.xpose.msra.mxu0 0.0
    %723 = vmatprep.subr.mxu0 0.0
    %724 = vmatpush1.xpose.msra.mxu0 0.0
    %725 = vmatprep.subr.mxu0 0.0
    %726 = vmatpush1.xpose.msra.mxu0 0.0
    %727 = vmatprep.subr.mxu0 0.0
    %728 = vmatpush1.xpose.msra.mxu0 0.0
    %729 = vmatprep.subr.mxu0 0.0
    %730 = vmatpush1.xpose.msra.mxu0 0.0
    %731 = vmatprep.subr.mxu0 0.0
    %732 = vmatpush1.xpose.msra.mxu0 0.0
    %733 = vmatprep.subr.mxu0 0.0
    %734 = vmatpush1.xpose.msra.mxu0 0.0
    %735 = vmatprep.subr.mxu0 0.0
    %736 = vmatpush1.xpose.msra.mxu0 0.0
    %737 = vmatprep.subr.mxu0 0.0
    %738 = vmatpush1.xpose.msra.mxu0 0.0
    %739 = vmatprep.subr.mxu0 0.0
    %740 = vmatpush1.xpose.msra.mxu0 0.0
    %741 = vmatprep.subr.mxu0 0.0
    %742 = vmatpush1.xpose.msra.mxu0 0.0
    %743 = vmatprep.subr.mxu0 0.0
    %744 = vmatpush1.xpose.msra.mxu0 0.0
    %745 = vmatprep.subr.mxu0 0.0
    %746 = vmatpush1.xpose.msra.mxu0 0.0
    %747 = vmatprep.subr.mxu0 0.0
    %748 = vmatpush1.xpose.msra.mxu0 0.0
    %749 = vmatprep.subr.mxu0 0.0
    %750 = vmatpush1.xpose.msra.mxu0 0.0
    %751 = vmatprep.subr.mxu0 0.0
    %752 = vmatpush1.xpose.msra.mxu0 0.0
    %753 = vmatprep.subr.mxu0 0.0
    %754 = vmatpush1.xpose.msra.mxu0 0.0
    %755 = vmatprep.subr.mxu0 0.0
    %756 = vmatpush1.xpose.msra.mxu0 0.0
    %757 = vmatprep.subr.mxu0 0.0
    %758 = vmatpush1.xpose.msra.mxu0 0.0
    %759 = vmatprep.subr.mxu0 0.0
    %760 = vmatpush1.xpose.msra.mxu0 0.0
    %761 = vmatprep.subr.mxu0 0.0
    %762 = vmatpush1.xpose.msra.mxu0 0.0
    %763 = vmatprep.subr.mxu0 0.0
    %764 = vmatpush1.xpose.msra.mxu0 0.0
    %765 = vmatprep.subr.mxu0 0.0
    %766 = vmatpush1.xpose.msra.mxu0 0.0
    %767 = vmatprep.subr.mxu0 0.0
    %768 = vmatpush1.xpose.msra.mxu0 0.0
    %769 = vmatprep.subr.mxu0 0.0
    %770 = vmatpush1.xpose.msra.mxu0 0.0
    %771 = vmatprep.subr.mxu0 0.0
    %772 = vmatpush1.xpose.msra.mxu0 0.0
    %773 = vmatprep.subr.mxu0 0.0
    %774 = vmatpush1.xpose.msra.mxu0 0.0
    %775 = vmatprep.subr.mxu0 0.0
    %776 = vmatpush1.xpose.msra.mxu0 0.0
    %777 = vmatprep.subr.mxu0 0.0
    %778 = vmatpush1.xpose.msra.mxu0 0.0
    %779 = vmatprep.mubr.f32.mxu0 0.0
    %780 = vmatmul.mubr.f32.gmra.mrb[0].mxu0 %v711
    %v781 = vpop.f32.mrb[0].mxu0
    %v782 = vadd.f32 0.0, %v781
    %v783 = vpop.f32.mrb[0].mxu0
    %784 = vdwg.mxu0
    %v785 = vsel %vm301, %v782, -inf
    %786 = vmax.xlane.f32.xlu0 %v785
    %v787 = vpop.xlane.xlu0 %786
    %v788 = vsub.f32 %v782, %v787
    %v789 = vmul.f32 %v788, 1.442695
    %v790 = vpow.pop %v789
    %v791 = vsel %vm301, %v790, 0.0
    %792 = vadd.xlane.f32.xlu0 %v791
    %v793 = vpop.xlane.xlu0 %792
    %v794 = vrcp.pop %v793
    %v795 = vmul.f32 %v790, %v794
    %796 = vrot.lane.b32.xlu0 %v222, 64
    %v797 = vpop.permute.xlu0 %796
    %v800 = vsel %vm301, %v795, 0
    %802 = vmatprep.subr.mxu0 0.0
    %803 = vmatpush1.msra.mxu0 %v797
    %804 = vmatprep.subr.mxu0 0.0
    %805 = vmatpush1.msra.mxu0 0.0
    %806 = vmatprep.subr.mxu0 0.0
    %807 = vmatpush1.msra.mxu0 0.0
    %808 = vmatprep.subr.mxu0 0.0
    %809 = vmatpush1.msra.mxu0 0.0
    %810 = vmatprep.subr.mxu0 0.0
    %811 = vmatpush1.msra.mxu0 0.0
    %812 = vmatprep.subr.mxu0 0.0
    %813 = vmatpush1.msra.mxu0 0.0
    %814 = vmatprep.subr.mxu0 0.0
    %815 = vmatpush1.msra.mxu0 0.0
    %816 = vmatprep.subr.mxu0 0.0
    %817 = vmatpush1.msra.mxu0 0.0
    %818 = vmatprep.subr.mxu0 0.0
    %819 = vmatpush1.msra.mxu0 0.0
    %820 = vmatprep.subr.mxu0 0.0
    %821 = vmatpush1.msra.mxu0 0.0
    %822 = vmatprep.subr.mxu0 0.0
    %823 = vmatpush1.msra.mxu0 0.0
    %824 = vmatprep.subr.mxu0 0.0
    %825 = vmatpush1.msra.mxu0 0.0
    %826 = vmatprep.subr.mxu0 0.0
    %827 = vmatpush1.msra.mxu0 0.0
    %828 = vmatprep.subr.mxu0 0.0
    %829 = vmatpush1.msra.mxu0 0.0
    %830 = vmatprep.subr.mxu0 0.0
    %831 = vmatpush1.msra.mxu0 0.0
    %832 = vmatprep.subr.mxu0 0.0
    %833 = vmatpush1.msra.mxu0 0.0
    %834 = vmatprep.subr.mxu0 0.0
    %835 = vmatpush1.msra.mxu0 0.0
    %836 = vmatprep.subr.mxu0 0.0
    %837 = vmatpush1.msra.mxu0 0.0
    %838 = vmatprep.subr.mxu0 0.0
    %839 = vmatpush1.msra.mxu0 0.0
    %840 = vmatprep.subr.mxu0 0.0
    %841 = vmatpush1.msra.mxu0 0.0
    %842 = vmatprep.subr.mxu0 0.0
    %843 = vmatpush1.msra.mxu0 0.0
    %844 = vmatprep.subr.mxu0 0.0
    %845 = vmatpush1.msra.mxu0 0.0
    %846 = vmatprep.subr.mxu0 0.0
    %847 = vmatpush1.msra.mxu0 0.0
    %848 = vmatprep.subr.mxu0 0.0
    %849 = vmatpush1.msra.mxu0 0.0
    %850 = vmatprep.subr.mxu0 0.0
    %851 = vmatpush1.msra.mxu0 0.0
    %852 = vmatprep.subr.mxu0 0.0
    %853 = vmatpush1.msra.mxu0 0.0
    %854 = vmatprep.subr.mxu0 0.0
    %855 = vmatpush1.msra.mxu0 0.0
    %856 = vmatprep.subr.mxu0 0.0
    %857 = vmatpush1.msra.mxu0 0.0
    %858 = vmatprep.subr.mxu0 0.0
    %859 = vmatpush1.msra.mxu0 0.0
    %860 = vmatprep.subr.mxu0 0.0
    %861 = vmatpush1.msra.mxu0 0.0
    %862 = vmatprep.subr.mxu0 0.0
    %863 = vmatpush1.msra.mxu0 0.0
    %864 = vmatprep.subr.mxu0 0.0
    %865 = vmatpush1.msra.mxu0 0.0
    %866 = vmatprep.mubr.f32.mxu0 0.0
    %867 = vmatmul.mubr.f32.gmra.mrb[0].mxu0 %v800
    %v868 = vpop.f32.mrb[0].mxu0
    %v869 = vadd.f32 0.0, %v868
    %v870 = vpop.f32.mrb[0].mxu0
    %871 = vdwg.mxu0
    %s872 = scalar_lea.vmem [#allocation5], 64
    %v873 = vld [vmem:[%s872] sm:$0xff]
    %v874 = vld [vmem:[%s872 + $0x8] sm:$0xff]
    %v875 = vld [vmem:[%s872 + $0x10] sm:$0xff]
    %v876 = vld [vmem:[%s872 + $0x18] sm:$0xff]
    %v878 = vsel %vm80, %v869, 0
    %880 = vmatprep.subr.mxu0 0.0
    %881 = vmatpush1.msra.mxu0 %v873
    %882 = vmatprep.subr.mxu0 0.0
    %883 = vmatpush1.msra.mxu0 %v874
    %884 = vmatprep.subr.mxu0 0.0
    %885 = vmatpush1.msra.mxu0 %v875
    %886 = vmatprep.subr.mxu0 0.0
    %887 = vmatpush1.msra.mxu0 %v876
    %888 = vmatprep.subr.mxu0 0.0
    %889 = vmatpush1.msra.mxu0 0.0
    %890 = vmatprep.subr.mxu0 0.0
    %891 = vmatpush1.msra.mxu0 0.0
    %892 = vmatprep.subr.mxu0 0.0
    %893 = vmatpush1.msra.mxu0 0.0
    %894 = vmatprep.subr.mxu0 0.0
    %895 = vmatpush1.msra.mxu0 0.0
    %896 = vmatprep.subr.mxu0 0.0
    %897 = vmatpush1.msra.mxu0 0.0
    %898 = vmatprep.subr.mxu0 0.0
    %899 = vmatpush1.msra.mxu0 0.0
    %900 = vmatprep.subr.mxu0 0.0
    %901 = vmatpush1.msra.mxu0 0.0
    %902 = vmatprep.subr.mxu0 0.0
    %903 = vmatpush1.msra.mxu0 0.0
    %904 = vmatprep.subr.mxu0 0.0
    %905 = vmatpush1.msra.mxu0 0.0
    %906 = vmatprep.subr.mxu0 0.0
    %907 = vmatpush1.msra.mxu0 0.0
    %908 = vmatprep.subr.mxu0 0.0
    %909 = vmatpush1.msra.mxu0 0.0
    %910 = vmatprep.subr.mxu0 0.0
    %911 = vmatpush1.msra.mxu0 0.0
    %912 = vmatprep.subr.mxu0 0.0
    %913 = vmatpush1.msra.mxu0 0.0
    %914 = vmatprep.subr.mxu0 0.0
    %915 = vmatpush1.msra.mxu0 0.0
    %916 = vmatprep.subr.mxu0 0.0
    %917 = vmatpush1.msra.mxu0 0.0
    %918 = vmatprep.subr.mxu0 0.0
    %919 = vmatpush1.msra.mxu0 0.0
    %920 = vmatprep.subr.mxu0 0.0
    %921 = vmatpush1.msra.mxu0 0.0
    %922 = vmatprep.subr.mxu0 0.0
    %923 = vmatpush1.msra.mxu0 0.0
    %924 = vmatprep.subr.mxu0 0.0
    %925 = vmatpush1.msra.mxu0 0.0
    %926 = vmatprep.subr.mxu0 0.0
    %927 = vmatpush1.msra.mxu0 0.0
    %928 = vmatprep.subr.mxu0 0.0
    %929 = vmatpush1.msra.mxu0 0.0
    %930 = vmatprep.subr.mxu0 0.0
    %931 = vmatpush1.msra.mxu0 0.0
    %932 = vmatprep.subr.mxu0 0.0
    %933 = vmatpush1.msra.mxu0 0.0
    %934 = vmatprep.subr.mxu0 0.0
    %935 = vmatpush1.msra.mxu0 0.0
    %936 = vmatprep.subr.mxu0 0.0
    %937 = vmatpush1.msra.mxu0 0.0
    %938 = vmatprep.subr.mxu0 0.0
    %939 = vmatpush1.msra.mxu0 0.0
    %940 = vmatprep.subr.mxu0 0.0
    %941 = vmatpush1.msra.mxu0 0.0
    %942 = vmatprep.subr.mxu0 0.0
    %943 = vmatpush1.msra.mxu0 0.0
    %944 = vmatprep.mubr.f32.mxu0 0.0
    %945 = vmatmul.mubr.f32.gmra.mrb[0].mxu0 %v878
    %v946 = vpop.f32.mrb[0].mxu0
    %v947 = vadd.f32 0.0, %v946
    %v948 = vpop.f32.mrb[0].mxu0
    %949 = vdwg.mxu0
    %v950 = vadd.f32 %v704, %v947
    %951 = vrot.lane.b32.xlu0 %v151, 32
    %v952 = vpop.permute.xlu0 %951
    %953 = vrot.lane.b32.xlu0 %v153, 32
    %v954 = vpop.permute.xlu0 %953
    %v955 = vsel %vm80, %v952, 0
    %v957 = vsel %vm80, %v954, 0
    %959 = vmatprep.subr.mxu0 0.0
    %960 = vmatpush1.xpose.msra.mxu0 %v957
    %961 = vmatprep.subr.mxu0 0.0
    %962 = vmatpush1.xpose.msra.mxu0 0.0
    %963 = vmatprep.subr.mxu0 0.0
    %964 = vmatpush1.xpose.msra.mxu0 0.0
    %965 = vmatprep.subr.mxu0 0.0
    %966 = vmatpush1.xpose.msra.mxu0 0.0
    %967 = vmatprep.subr.mxu0 0.0
    %968 = vmatpush1.xpose.msra.mxu0 0.0
    %969 = vmatprep.subr.mxu0 0.0
    %970 = vmatpush1.xpose.msra.mxu0 0.0
    %971 = vmatprep.subr.mxu0 0.0
    %972 = vmatpush1.xpose.msra.mxu0 0.0
    %973 = vmatprep.subr.mxu0 0.0
    %974 = vmatpush1.xpose.msra.mxu0 0.0
    %975 = vmatprep.subr.mxu0 0.0
    %976 = vmatpush1.xpose.msra.mxu0 0.0
    %977 = vmatprep.subr.mxu0 0.0
    %978 = vmatpush1.xpose.msra.mxu0 0.0
    %979 = vmatprep.subr.mxu0 0.0
    %980 = vmatpush1.xpose.msra.mxu0 0.0
    %981 = vmatprep.subr.mxu0 0.0
    %982 = vmatpush1.xpose.msra.mxu0 0.0
    %983 = vmatprep.subr.mxu0 0.0
    %984 = vmatpush1.xpose.msra.mxu0 0.0
    %985 = vmatprep.subr.mxu0 0.0
    %986 = vmatpush1.xpose.msra.mxu0 0.0
    %987 = vmatprep.subr.mxu0 0.0
    %988 = vmatpush1.xpose.msra.mxu0 0.0
    %989 = vmatprep.subr.mxu0 0.0
    %990 = vmatpush1.xpose.msra.mxu0 0.0
    %991 = vmatprep.subr.mxu0 0.0
    %992 = vmatpush1.xpose.msra.mxu0 0.0
    %993 = vmatprep.subr.mxu0 0.0
    %994 = vmatpush1.xpose.msra.mxu0 0.0
    %995 = vmatprep.subr.mxu0 0.0
    %996 = vmatpush1.xpose.msra.mxu0 0.0
    %997 = vmatprep.subr.mxu0 0.0
    %998 = vmatpush1.xpose.msra.mxu0 0.0
    %999 = vmatprep.subr.mxu0 0.0
    %1000 = vmatpush1.xpose.msra.mxu0 0.0
    %1001 = vmatprep.subr.mxu0 0.0
    %1002 = vmatpush1.xpose.msra.mxu0 0.0
    %1003 = vmatprep.subr.mxu0 0.0
    %1004 = vmatpush1.xpose.msra.mxu0 0.0
    %1005 = vmatprep.subr.mxu0 0.0
    %1006 = vmatpush1.xpose.msra.mxu0 0.0
    %1007 = vmatprep.subr.mxu0 0.0
    %1008 = vmatpush1.xpose.msra.mxu0 0.0
    %1009 = vmatprep.subr.mxu0 0.0
    %1010 = vmatpush1.xpose.msra.mxu0 0.0
    %1011 = vmatprep.subr.mxu0 0.0
    %1012 = vmatpush1.xpose.msra.mxu0 0.0
    %1013 = vmatprep.subr.mxu0 0.0
    %1014 = vmatpush1.xpose.msra.mxu0 0.0
    %1015 = vmatprep.subr.mxu0 0.0
    %1016 = vmatpush1.xpose.msra.mxu0 0.0
    %1017 = vmatprep.subr.mxu0 0.0
    %1018 = vmatpush1.xpose.msra.mxu0 0.0
    %1019 = vmatprep.subr.mxu0 0.0
    %1020 = vmatpush1.xpose.msra.mxu0 0.0
    %1021 = vmatprep.subr.mxu0 0.0
    %1022 = vmatpush1.xpose.msra.mxu0 0.0
    %1023 = vmatprep.mubr.f32.mxu0 0.0
    %1024 = vmatmul.mubr.f32.gmra.mrb[0].mxu0 %v955
    %v1025 = vpop.f32.mrb[0].mxu0
    %v1026 = vadd.f32 0.0, %v1025
    %v1027 = vpop.f32.mrb[0].mxu0
    %1028 = vdwg.mxu0
    %v1029 = vsel %vm301, %v1026, -inf
    %1030 = vmax.xlane.f32.xlu0 %v1029
    %v1031 = vpop.xlane.xlu0 %1030
    %v1032 = vsub.f32 %v1026, %v1031
    %v1033 = vmul.f32 %v1032, 1.442695
    %v1034 = vpow.pop %v1033
    %v1035 = vsel %vm301, %v1034, 0.0
    %1036 = vadd.xlane.f32.xlu0 %v1035
    %v1037 = vpop.xlane.xlu0 %1036
    %v1038 = vrcp.pop %v1037
    %v1039 = vmul.f32 %v1034, %v1038
    %1040 = vrot.lane.b32.xlu0 %v222, 32
    %v1041 = vpop.permute.xlu0 %1040
    %v1044 = vsel %vm301, %v1039, 0
    %1046 = vmatprep.subr.mxu0 0.0
    %1047 = vmatpush1.msra.mxu0 %v1041
    %1048 = vmatprep.subr.mxu0 0.0
    %1049 = vmatpush1.msra.mxu0 0.0
    %1050 = vmatprep.subr.mxu0 0.0
    %1051 = vmatpush1.msra.mxu0 0.0
    %1052 = vmatprep.subr.mxu0 0.0
    %1053 = vmatpush1.msra.mxu0 0.0
    %1054 = vmatprep.subr.mxu0 0.0
    %1055 = vmatpush1.msra.mxu0 0.0
    %1056 = vmatprep.subr.mxu0 0.0
    %1057 = vmatpush1.msra.mxu0 0.0
    %1058 = vmatprep.subr.mxu0 0.0
    %1059 = vmatpush1.msra.mxu0 0.0
    %1060 = vmatprep.subr.mxu0 0.0
    %1061 = vmatpush1.msra.mxu0 0.0
    %1062 = vmatprep.subr.mxu0 0.0
    %1063 = vmatpush1.msra.mxu0 0.0
    %1064 = vmatprep.subr.mxu0 0.0
    %1065 = vmatpush1.msra.mxu0 0.0
    %1066 = vmatprep.subr.mxu0 0.0
    %1067 = vmatpush1.msra.mxu0 0.0
    %1068 = vmatprep.subr.mxu0 0.0
    %1069 = vmatpush1.msra.mxu0 0.0
    %1070 = vmatprep.subr.mxu0 0.0
    %1071 = vmatpush1.msra.mxu0 0.0
    %1072 = vmatprep.subr.mxu0 0.0
    %1073 = vmatpush1.msra.mxu0 0.0
    %1074 = vmatprep.subr.mxu0 0.0
    %1075 = vmatpush1.msra.mxu0 0.0
    %1076 = vmatprep.subr.mxu0 0.0
    %1077 = vmatpush1.msra.mxu0 0.0
    %1078 = vmatprep.subr.mxu0 0.0
    %1079 = vmatpush1.msra.mxu0 0.0
    %1080 = vmatprep.subr.mxu0 0.0
    %1081 = vmatpush1.msra.mxu0 0.0
    %1082 = vmatprep.subr.mxu0 0.0
    %1083 = vmatpush1.msra.mxu0 0.0
    %1084 = vmatprep.subr.mxu0 0.0
    %1085 = vmatpush1.msra.mxu0 0.0
    %1086 = vmatprep.subr.mxu0 0.0
    %1087 = vmatpush1.msra.mxu0 0.0
    %1088 = vmatprep.subr.mxu0 0.0
    %1089 = vmatpush1.msra.mxu0 0.0
    %1090 = vmatprep.subr.mxu0 0.0
    %1091 = vmatpush1.msra.mxu0 0.0
    %1092 = vmatprep.subr.mxu0 0.0
    %1093 = vmatpush1.msra.mxu0 0.0
    %1094 = vmatprep.subr.mxu0 0.0
    %1095 = vmatpush1.msra.mxu0 0.0
    %1096 = vmatprep.subr.mxu0 0.0
    %1097 = vmatpush1.msra.mxu0 0.0
    %1098 = vmatprep.subr.mxu0 0.0
    %1099 = vmatpush1.msra.mxu0 0.0
    %1100 = vmatprep.subr.mxu0 0.0
    %1101 = vmatpush1.msra.mxu0 0.0
    %1102 = vmatprep.subr.mxu0 0.0
    %1103 = vmatpush1.msra.mxu0 0.0
    %1104 = vmatprep.subr.mxu0 0.0
    %1105 = vmatpush1.msra.mxu0 0.0
    %1106 = vmatprep.subr.mxu0 0.0
    %1107 = vmatpush1.msra.mxu0 0.0
    %1108 = vmatprep.subr.mxu0 0.0
    %1109 = vmatpush1.msra.mxu0 0.0
    %1110 = vmatprep.mubr.f32.mxu0 0.0
    %1111 = vmatmul.mubr.f32.gmra.mrb[0].mxu0 %v1044
    %v1112 = vpop.f32.mrb[0].mxu0
    %v1113 = vadd.f32 0.0, %v1112
    %v1114 = vpop.f32.mrb[0].mxu0
    %1115 = vdwg.mxu0
    %s1116 = scalar_lea.vmem [#allocation5], 96
    %v1117 = vld [vmem:[%s1116] sm:$0xff]
    %v1118 = vld [vmem:[%s1116 + $0x8] sm:$0xff]
    %v1119 = vld [vmem:[%s1116 + $0x10] sm:$0xff]
    %v1120 = vld [vmem:[%s1116 + $0x18] sm:$0xff]
    %v1122 = vsel %vm80, %v1113, 0
    %1124 = vmatprep.subr.mxu0 0.0
    %1125 = vmatpush1.msra.mxu0 %v1117
    %1126 = vmatprep.subr.mxu0 0.0
    %1127 = vmatpush1.msra.mxu0 %v1118
    %1128 = vmatprep.subr.mxu0 0.0
    %1129 = vmatpush1.msra.mxu0 %v1119
    %1130 = vmatprep.subr.mxu0 0.0
    %1131 = vmatpush1.msra.mxu0 %v1120
    %1132 = vmatprep.subr.mxu0 0.0
    %1133 = vmatpush1.msra.mxu0 0.0
    %1134 = vmatprep.subr.mxu0 0.0
    %1135 = vmatpush1.msra.mxu0 0.0
    %1136 = vmatprep.subr.mxu0 0.0
    %1137 = vmatpush1.msra.mxu0 0.0
    %1138 = vmatprep.subr.mxu0 0.0
    %1139 = vmatpush1.msra.mxu0 0.0
    %1140 = vmatprep.subr.mxu0 0.0
    %1141 = vmatpush1.msra.mxu0 0.0
    %1142 = vmatprep.subr.mxu0 0.0
    %1143 = vmatpush1.msra.mxu0 0.0
    %1144 = vmatprep.subr.mxu0 0.0
    %1145 = vmatpush1.msra.mxu0 0.0
    %1146 = vmatprep.subr.mxu0 0.0
    %1147 = vmatpush1.msra.mxu0 0.0
    %1148 = vmatprep.subr.mxu0 0.0
    %1149 = vmatpush1.msra.mxu0 0.0
    %1150 = vmatprep.subr.mxu0 0.0
    %1151 = vmatpush1.msra.mxu0 0.0
    %1152 = vmatprep.subr.mxu0 0.0
    %1153 = vmatpush1.msra.mxu0 0.0
    %1154 = vmatprep.subr.mxu0 0.0
    %1155 = vmatpush1.msra.mxu0 0.0
    %1156 = vmatprep.subr.mxu0 0.0
    %1157 = vmatpush1.msra.mxu0 0.0
    %1158 = vmatprep.subr.mxu0 0.0
    %1159 = vmatpush1.msra.mxu0 0.0
    %1160 = vmatprep.subr.mxu0 0.0
    %1161 = vmatpush1.msra.mxu0 0.0
    %1162 = vmatprep.subr.mxu0 0.0
    %1163 = vmatpush1.msra.mxu0 0.0
    %1164 = vmatprep.subr.mxu0 0.0
    %1165 = vmatpush1.msra.mxu0 0.0
    %1166 = vmatprep.subr.mxu0 0.0
    %1167 = vmatpush1.msra.mxu0 0.0
    %1168 = vmatprep.subr.mxu0 0.0
    %1169 = vmatpush1.msra.mxu0 0.0
    %1170 = vmatprep.subr.mxu0 0.0
    %1171 = vmatpush1.msra.mxu0 0.0
    %1172 = vmatprep.subr.mxu0 0.0
    %1173 = vmatpush1.msra.mxu0 0.0
    %1174 = vmatprep.subr.mxu0 0.0
    %1175 = vmatpush1.msra.mxu0 0.0
    %1176 = vmatprep.subr.mxu0 0.0
    %1177 = vmatpush1.msra.mxu0 0.0
    %1178 = vmatprep.subr.mxu0 0.0
    %1179 = vmatpush1.msra.mxu0 0.0
    %1180 = vmatprep.subr.mxu0 0.0
    %1181 = vmatpush1.msra.mxu0 0.0
    %1182 = vmatprep.subr.mxu0 0.0
    %1183 = vmatpush1.msra.mxu0 0.0
    %1184 = vmatprep.subr.mxu0 0.0
    %1185 = vmatpush1.msra.mxu0 0.0
    %1186 = vmatprep.subr.mxu0 0.0
    %1187 = vmatpush1.msra.mxu0 0.0
    %1188 = vmatprep.mubr.f32.mxu0 0.0
    %1189 = vmatmul.mubr.f32.gmra.mrb[0].mxu0 %v1122
    %v1190 = vpop.f32.mrb[0].mxu0
    %v1191 = vadd.f32 0.0, %v1190
    %v1192 = vpop.f32.mrb[0].mxu0
    %1193 = vdwg.mxu0
    %v1194 = vadd.f32 %v950, %v1191
    %v1195 = vadd.f32 %v67, %v1194
    %v1196 = vld [vmem:[%s7] sm:$0x1]
    %v1197 = vld [vmem:[%s8] sm:$0x1]
    %v1198 = vsel %vm80, %v1195, 0.0
    %1199 = vadd.xlane.f32.xlu0 %v1198
    %v1200 = vpop.xlane.xlu0 %1199
    %v1201 = vrcp.pop 32.0
    %v1202 = vmul.f32 %v1200, %v1201
    %v1203 = vsub.f32 %v1195, %v1202
    %v1204 = vmul.f32 %v1203, %v1203
    %v1205 = vsel %vm80, %v1204, 0.0
    %1206 = vadd.xlane.f32.xlu0 %v1205
    %v1207 = vpop.xlane.xlu0 %1206
    %v1208 = vmul.f32 %v1207, %v1201
    %v1209 = vadd.f32 %v1208, 1e-05
    %v1210 = vrsqrt.pop %v1209
    %v1211 = vmul.f32 %v1203, %v1210
    %v1213 = vlaneseq
    %v1214 = vshrl.u32 %v1213, 7
    %v1215 = vsub.s32 0, %v1214
    %v1216 = vrot.slane %v1196, %v1215
    %v1218 = vmul.f32 %v1211, %v1216
    %v1220 = vlaneseq
    %v1221 = vshrl.u32 %v1220, 7
    %v1222 = vsub.s32 0, %v1221
    %v1223 = vrot.slane %v1197, %v1222
    %v1225 = vadd.f32 %v1218, %v1223
    %v1226 = vld [vmem:[%s3] sm:$0xff]
    %v1227 = vld [vmem:[%s3 + $0x8] sm:$0xff]
    %v1228 = vld [vmem:[%s3 + $0x10] sm:$0xff]
    %v1229 = vld [vmem:[%s3 + $0x18] sm:$0xff]
    %v1230 = vld [vmem:[%s4] sm:$0x1]
    %v1232 = vlaneseq
    %v1233 = vshrl.u32 %v1232, 7
    %v1234 = vsub.s32 0, %v1233
    %v1235 = vrot.slane %v1230, %v1234
    %v1238 = vsel %vm80, %v1225, 0
    %1240 = vmatprep.subr.mxu0 0.0
    %1241 = vmatpush1.msra.mxu0 %v1226
    %1242 = vmatprep.subr.mxu0 0.0
    %1243 = vmatpush1.msra.mxu0 %v1227
    %1244 = vmatprep.subr.mxu0 0.0
    %1245 = vmatpush1.msra.mxu0 %v1228
    %1246 = vmatprep.subr.mxu0 0.0
    %1247 = vmatpush1.msra.mxu0 %v1229
    %1248 = vmatprep.subr.mxu0 0.0
    %1249 = vmatpush1.msra.mxu0 0.0
    %1250 = vmatprep.subr.mxu0 0.0
    %1251 = vmatpush1.msra.mxu0 0.0
    %1252 = vmatprep.subr.mxu0 0.0
    %1253 = vmatpush1.msra.mxu0 0.0
    %1254 = vmatprep.subr.mxu0 0.0
    %1255 = vmatpush1.msra.mxu0 0.0
    %1256 = vmatprep.subr.mxu0 0.0
    %1257 = vmatpush1.msra.mxu0 0.0
    %1258 = vmatprep.subr.mxu0 0.0
    %1259 = vmatpush1.msra.mxu0 0.0
    %1260 = vmatprep.subr.mxu0 0.0
    %1261 = vmatpush1.msra.mxu0 0.0
    %1262 = vmatprep.subr.mxu0 0.0
    %1263 = vmatpush1.msra.mxu0 0.0
    %1264 = vmatprep.subr.mxu0 0.0
    %1265 = vmatpush1.msra.mxu0 0.0
    %1266 = vmatprep.subr.mxu0 0.0
    %1267 = vmatpush1.msra.mxu0 0.0
    %1268 = vmatprep.subr.mxu0 0.0
    %1269 = vmatpush1.msra.mxu0 0.0
    %1270 = vmatprep.subr.mxu0 0.0
    %1271 = vmatpush1.msra.mxu0 0.0
    %1272 = vmatprep.subr.mxu0 0.0
    %1273 = vmatpush1.msra.mxu0 0.0
    %1274 = vmatprep.subr.mxu0 0.0
    %1275 = vmatpush1.msra.mxu0 0.0
    %1276 = vmatprep.subr.mxu0 0.0
    %1277 = vmatpush1.msra.mxu0 0.0
    %1278 = vmatprep.subr.mxu0 0.0
    %1279 = vmatpush1.msra.mxu0 0.0
    %1280 = vmatprep.subr.mxu0 0.0
    %1281 = vmatpush1.msra.mxu0 0.0
    %1282 = vmatprep.subr.mxu0 0.0
    %1283 = vmatpush1.msra.mxu0 0.0
    %1284 = vmatprep.subr.mxu0 0.0
    %1285 = vmatpush1.msra.mxu0 0.0
    %1286 = vmatprep.subr.mxu0 0.0
    %1287 = vmatpush1.msra.mxu0 0.0
    %1288 = vmatprep.subr.mxu0 0.0
    %1289 = vmatpush1.msra.mxu0 0.0
    %1290 = vmatprep.subr.mxu0 0.0
    %1291 = vmatpush1.msra.mxu0 0.0
    %1292 = vmatprep.subr.mxu0 0.0
    %1293 = vmatpush1.msra.mxu0 0.0
    %1294 = vmatprep.subr.mxu0 0.0
    %1295 = vmatpush1.msra.mxu0 0.0
    %1296 = vmatprep.subr.mxu0 0.0
    %1297 = vmatpush1.msra.mxu0 0.0
    %1298 = vmatprep.subr.mxu0 0.0
    %1299 = vmatpush1.msra.mxu0 0.0
    %1300 = vmatprep.subr.mxu0 0.0
    %1301 = vmatpush1.msra.mxu0 0.0
    %1302 = vmatprep.subr.mxu0 0.0
    %1303 = vmatpush1.msra.mxu0 0.0
    %1304 = vmatprep.mubr.f32.mxu0 0.0
    %1305 = vmatmul.mubr.f32.gmra.mrb[0].mxu0 %v1238
    %v1306 = vpop.f32.mrb[0].mxu0
    %v1307 = vadd.f32 %v1235, %v1306
    %v1308 = vpop.f32.mrb[0].mxu0
    %1309 = vdwg.mxu0
    %v1310 = vmax.f32 %v1307, 0.0
    %v1311 = vld [vmem:[%s5] sm:$0xff]
    %v1312 = vld [vmem:[%s5 + $0x8] sm:$0xff]
    %v1313 = vld [vmem:[%s6] sm:$0x1]
    %v1315 = vlaneseq
    %v1316 = vshrl.u32 %v1315, 7
    %v1317 = vsub.s32 0, %v1316
    %v1318 = vrot.slane %v1313, %v1317
    %vm1320 = vcmask 130048
    %v1322 = vsel %vm1320, %v1310, 0
    %1324 = vmatprep.subr.mxu0 0.0
    %1325 = vmatpush1.msra.mxu0 %v1311
    %1326 = vmatprep.subr.mxu0 0.0
    %1327 = vmatpush1.msra.mxu0 %v1312
    %1328 = vmatprep.subr.mxu0 0.0
    %1329 = vmatpush1.msra.mxu0 0.0
    %1330 = vmatprep.subr.mxu0 0.0
    %1331 = vmatpush1.msra.mxu0 0.0
    %1332 = vmatprep.subr.mxu0 0.0
    %1333 = vmatpush1.msra.mxu0 0.0
    %1334 = vmatprep.subr.mxu0 0.0
    %1335 = vmatpush1.msra.mxu0 0.0
    %1336 = vmatprep.subr.mxu0 0.0
    %1337 = vmatpush1.msra.mxu0 0.0
    %1338 = vmatprep.subr.mxu0 0.0
    %1339 = vmatpush1.msra.mxu0 0.0
    %1340 = vmatprep.subr.mxu0 0.0
    %1341 = vmatpush1.msra.mxu0 0.0
    %1342 = vmatprep.subr.mxu0 0.0
    %1343 = vmatpush1.msra.mxu0 0.0
    %1344 = vmatprep.subr.mxu0 0.0
    %1345 = vmatpush1.msra.mxu0 0.0
    %1346 = vmatprep.subr.mxu0 0.0
    %1347 = vmatpush1.msra.mxu0 0.0
    %1348 = vmatprep.subr.mxu0 0.0
    %1349 = vmatpush1.msra.mxu0 0.0
    %1350 = vmatprep.subr.mxu0 0.0
    %1351 = vmatpush1.msra.mxu0 0.0
    %1352 = vmatprep.subr.mxu0 0.0
    %1353 = vmatpush1.msra.mxu0 0.0
    %1354 = vmatprep.subr.mxu0 0.0
    %1355 = vmatpush1.msra.mxu0 0.0
    %1356 = vmatprep.subr.mxu0 0.0
    %1357 = vmatpush1.msra.mxu0 0.0
    %1358 = vmatprep.subr.mxu0 0.0
    %1359 = vmatpush1.msra.mxu0 0.0
    %1360 = vmatprep.subr.mxu0 0.0
    %1361 = vmatpush1.msra.mxu0 0.0
    %1362 = vmatprep.subr.mxu0 0.0
    %1363 = vmatpush1.msra.mxu0 0.0
    %1364 = vmatprep.subr.mxu0 0.0
    %1365 = vmatpush1.msra.mxu0 0.0
    %1366 = vmatprep.subr.mxu0 0.0
    %1367 = vmatpush1.msra.mxu0 0.0
    %1368 = vmatprep.subr.mxu0 0.0
    %1369 = vmatpush1.msra.mxu0 0.0
    %1370 = vmatprep.subr.mxu0 0.0
    %1371 = vmatpush1.msra.mxu0 0.0
    %1372 = vmatprep.subr.mxu0 0.0
    %1373 = vmatpush1.msra.mxu0 0.0
    %1374 = vmatprep.subr.mxu0 0.0
    %1375 = vmatpush1.msra.mxu0 0.0
    %1376 = vmatprep.subr.mxu0 0.0
    %1377 = vmatpush1.msra.mxu0 0.0
    %1378 = vmatprep.subr.mxu0 0.0
    %1379 = vmatpush1.msra.mxu0 0.0
    %1380 = vmatprep.subr.mxu0 0.0
    %1381 = vmatpush1.msra.mxu0 0.0
    %1382 = vmatprep.subr.mxu0 0.0
    %1383 = vmatpush1.msra.mxu0 0.0
    %1384 = vmatprep.subr.mxu0 0.0
    %1385 = vmatpush1.msra.mxu0 0.0
    %1386 = vmatprep.subr.mxu0 0.0
    %1387 = vmatpush1.msra.mxu0 0.0
    %1388 = vmatprep.mubr.f32.mxu0 0.0
    %1389 = vmatmul.mubr.f32.gmra.mrb[0].mxu0 %v1322
    %v1390 = vpop.f32.mrb[0].mxu0
    %v1391 = vadd.f32 %v1318, %v1390
    %v1392 = vpop.f32.mrb[0].mxu0
    %1393 = vdwg.mxu0
    %v1394 = vadd.f32 %v1225, %v1391
    %v1395 = vld [vmem:[%s9] sm:$0x1]
    %v1396 = vld [vmem:[%s10] sm:$0x1]
    %v1397 = vsel %vm80, %v1394, 0.0
    %1398 = vadd.xlane.f32.xlu0 %v1397
    %v1399 = vpop.xlane.xlu0 %1398
    %v1400 = vmul.f32 %v1399, %v1201
    %v1401 = vsub.f32 %v1394, %v1400
    %v1402 = vmul.f32 %v1401, %v1401
    %v1403 = vsel %vm80, %v1402, 0.0
    %1404 = vadd.xlane.f32.xlu0 %v1403
    %v1405 = vpop.xlane.xlu0 %1404
    %v1406 = vmul.f32 %v1405, %v1201
    %v1407 = vadd.f32 %v1406, 1e-05
    %v1408 = vrsqrt.pop %v1407
    %v1409 = vmul.f32 %v1401, %v1408
    %v1411 = vlaneseq
    %v1412 = vshrl.u32 %v1411, 7
    %v1413 = vsub.s32 0, %v1412
    %v1414 = vrot.slane %v1395, %v1413
    %v1416 = vmul.f32 %v1409, %v1414
    %v1418 = vlaneseq
    %v1419 = vshrl.u32 %v1418, 7
    %v1420 = vsub.s32 0, %v1419
    %v1421 = vrot.slane %v1396, %v1420
    %v1423 = vadd.f32 %v1416, %v1421
    %1424 = vst.msk [vmem:[#allocation7] sm:$0xff] %vm80, %v1423
    // Predicated region
    $region54: #{tpu_custom_call.1} parent=1 // pred_check
      _
    $region55: #{tpu_custom_call.1} parent=1 // pred_check_branch
      %1426 = sbr.rel (0) target = $region57
    $region56: #{tpu_custom_call.1} parent=1 // pred_region
      %s1428 = ssub.s32 128, 128
      %1429 = vsyncadd [#allocation4], %s1428
      %s1431 = sshll.u32 [#allocation7], 4
      %s1432 = int_to_ptr.vmem [resolvable:$true] %s1431
      %1434 = dma.vmem_to_hbm [thread:$0]  %s1432, 128, %s11, [#allocation4]
    $region57: #{tpu_custom_call.1} parent=1 // pred_fallthru
      _
    // Predicated region
    $region58: #{tpu_custom_call.1} parent=1 // pred_check
      _
    $region59: #{tpu_custom_call.1} parent=1 // pred_check_branch
      %1436 = sbr.rel (0) target = $region61
    $region60: #{tpu_custom_call.1} parent=1 // pred_region
      %1437 = dma.done [#allocation4], 128
    $region61: #{tpu_custom_call.1} parent=1 // pred_fallthru
      _
    %1438 = vsyncpa [#allocation3], 1
    %1439 = vsyncpa [#allocation6], 1
    %1440 = vsyncpa [#allocation4], 1

</llo_original>
